<compile_context>
chip_gen: v6e
topology: v6e:2x2x1
jax: 0.10.0
libtpu: 0.0.40
codegen_flags: <defaults>
</compile_context>

<pallas_src>
import jax
import jax.numpy as jnp
from jax.experimental import pallas as pl
from jax.experimental.pallas import tpu as pltpu


def _wadnet_kernel(x_ref, w1_ref, b1_ref, w2_ref, b2_ref, o_ref):
    # x_ref:  (256, TS)      one (batch, S-tile) slab, native channels-first layout
    # w1_ref: (256, 256)     conv1 weight (C_out, C_in), bf16
    # b1_ref: (256, 1)       conv1 bias, f32 (broadcast along lanes / S)
    # w2_ref: (out_ch, 256)  conv_swad weight (C_out, C_in), bf16
    # b2_ref: (out_ch, 1)    conv_swad bias, f32
    # o_ref:  (out_ch, TS)   f32, lane-dense along S
    x = x_ref[...].astype(jnp.bfloat16)          # no-op if input already bf16

    # First 1x1 conv: (256, 256) @ (256, TS) -> (256, TS), f32 accumulate on the MXU.
    h = jnp.dot(w1_ref[...], x, preferred_element_type=jnp.float32)
    h = jnp.maximum(h + b1_ref[...], 0.0)        # bias + ReLU in f32 (VPU)

    # Second 1x1 conv: (out_ch, 256) @ (256, TS) -> (out_ch, TS).
    y = jnp.dot(w2_ref[...], h.astype(jnp.bfloat16), preferred_element_type=jnp.float32)
    o_ref[...] = (y + b2_ref[...]).astype(o_ref.dtype)


def _pick_tile_s(S):
    # Full-extent block when small; otherwise a 512-column tile (multiple of 128 lanes,
    # ~2.5 MiB double-buffered working set -> fits every generation's scoped VMEM default).
    return S if S <= 512 else 512


def wadnet_forward(vp_features, params, num_angle, num_depth, end_points=None):
    """vp_features: (B, 256, S) float32 (or bfloat16), matching the PyTorch NCW layout.

    Returns dict with 'grasp_score_pred' and 'grasp_width_pred',
    each of shape (B, S, num_angle, num_depth) — identical to PyTorch.
    """
    B, C, S = vp_features.shape
    assert C == 256
    out_ch = 2 * num_angle * num_depth

    TS = _pick_tile_s(S)
    grid = (B, pl.cdiv(S, TS))

    # Weights stay in PyTorch's (C_out, C_in) layout (Conv1d weight squeezed), bf16 for
    # the MXU; biases f32 as (C_out, 1) columns so they broadcast along the lane axis.
    w1 = params["w1"].astype(jnp.bfloat16)                       # (256, 256)
    b1 = params["b1"].reshape(256, 1).astype(jnp.float32)
    w2 = params["w2"].astype(jnp.bfloat16)                       # (out_ch, 256)
    b2 = params["b2"].reshape(out_ch, 1).astype(jnp.float32)

    x_bytes = 2 if vp_features.dtype == jnp.bfloat16 else 4
    cost = pl.CostEstimate(
        flops=2 * B * S * 256 * (256 + out_ch),
        transcendentals=0,
        bytes_accessed=(B * S * 256 * x_bytes            # input read
                        + B * S * out_ch * 4             # output write (unpadded, f32)
                        + 256 * 256 * 2 + out_ch * 256 * 2
                        + (256 + out_ch) * 4),
    )

    y = pl.pallas_call(
        _wadnet_kernel,
        out_shape=jax.ShapeDtypeStruct((B, out_ch, S), jnp.float32),
        grid_spec=pl.GridSpec(
            grid=grid,
            in_specs=[
                pl.BlockSpec((None, 256, TS), lambda b, s: (b, 0, s)),   # x, native NCW
                pl.BlockSpec((256, 256), lambda b, s: (0, 0)),           # w1
                pl.BlockSpec((256, 1), lambda b, s: (0, 0)),             # b1
                pl.BlockSpec((out_ch, 256), lambda b, s: (0, 0)),        # w2 (unpadded)
                pl.BlockSpec((out_ch, 1), lambda b, s: (0, 0)),          # b2
            ],
            out_specs=pl.BlockSpec((None, out_ch, TS), lambda b, s: (b, 0, s)),
        ),
        compiler_params=pltpu.CompilerParams(
            dimension_semantics=("parallel", "parallel"),
        ),
        cost_estimate=cost,
    )(vp_features, w1, b1, w2, b2)

    # PyTorch: view(B, 2, A, D, S).permute(0, 1, 4, 2, 3) -> (B, 2, S, A, D).
    # y is the exact conv_swad NCW output, so this is the same tiny permute PyTorch
    # does, over only 2*A*D*S elements per batch — done in XLA, not in the kernel.
    y5 = y.reshape(B, 2, num_angle, num_depth, S)
    y5 = jnp.transpose(y5, (0, 1, 4, 2, 3))
    if end_points is None:
        end_points = {}
    end_points["grasp_score_pred"] = y5[:, 0]
    end_points["grasp_width_pred"] = y5[:, 1]
    return end_points


def init_params(key, num_angle, num_depth):
    out_ch = 2 * num_angle * num_depth
    k1, k2, k3, k4 = jax.random.split(key, 4)
    # PyTorch-shape-compatible: Conv1d weight (Cout, Cin, 1) squeezed to (Cout, Cin).
    return {
        "w1": jax.random.normal(k1, (256, 256), jnp.float32) * (1.0 / 16.0),
        "b1": jax.random.normal(k2, (256,), jnp.float32) * 0.01,
        "w2": jax.random.normal(k3, (out_ch, 256), jnp.float32) * (1.0 / 16.0),
        "b2": jax.random.normal(k4, (out_ch,), jnp.float32) * 0.01,
    }


def _reference(vp_features, params):
    # Pure-JAX reference of the two 1x1 convs (PyTorch NCW semantics), with the same
    # bf16-operand / f32-accumulate mixed precision the kernel uses.
    # TODO(synk): exact-f32 matmul parity with PyTorch would need f32 MXU passes.
    xb = vp_features.astype(jnp.bfloat16)
    w1b = params["w1"].astype(jnp.bfloat16)
    h = jnp.einsum("bcs,oc->bos", xb, w1b,
                   preferred_element_type=jnp.float32) + params["b1"][None, :, None]
    h = jnp.maximum(h, 0.0)
    w2b = params["w2"].astype(jnp.bfloat16)
    y = jnp.einsum("bcs,oc->bos", h.astype(jnp.bfloat16), w2b,
                   preferred_element_type=jnp.float32) + params["b2"][None, :, None]
    return y  # (B, 2*A*D, S)


if __name__ == "__main__":
    num_angle, num_depth = 4, 4
    B, C, S = 2, 256, 1024          # S > 512 so the S-tiling grid axis is exercised

    key = jax.random.PRNGKey(0)
    kx, kp = jax.random.split(key)
    vp_features = jax.random.normal(kx, (B, C, S), jnp.float32)
    params = init_params(kp, num_angle, num_depth)

    end_points = wadnet_forward(vp_features, params, num_angle, num_depth)
    score = jax.block_until_ready(end_points["grasp_score_pred"])
    width = jax.block_until_ready(end_points["grasp_width_pred"])

    # Check against a pure-JAX reference with PyTorch view/permute semantics.
    y_ref = _reference(vp_features, params)                       # (B, 2*A*D, S)
    y_ref = y_ref.reshape(B, 2, num_angle, num_depth, S)
    y_ref = jnp.transpose(y_ref, (0, 1, 4, 2, 3))                 # (B, 2, S, A, D)
    assert score.shape == (B, S, num_angle, num_depth)
    assert width.shape == (B, S, num_angle, num_depth)
    assert jnp.allclose(score, y_ref[:, 0], atol=2e-2, rtol=2e-2)
    assert jnp.allclose(width, y_ref[:, 1], atol=2e-2, rtol=2e-2)

    print("KERNEL_OK")
</pallas_src>

<mosaic_0001>
module attributes {stable_mosaic.version = 11 : i64} {
  func.func @_wadnet_kernel(%arg0: i32, %arg1: i32, %arg2: memref<1x256x512xf32, #tpu.memory_space<vmem>>, %arg3: memref<256x256xbf16, #tpu.memory_space<vmem>>, %arg4: memref<256x1xf32, #tpu.memory_space<vmem>>, %arg5: memref<32x256xbf16, #tpu.memory_space<vmem>>, %arg6: memref<32x1xf32, #tpu.memory_space<vmem>>, %arg7: memref<1x32x512xf32, #tpu.memory_space<vmem>>) attributes {dimension_semantics = [#tpu.dimension_semantics<parallel>, #tpu.dimension_semantics<parallel>], iteration_bounds = array<i64: 2, 2>, scalar_prefetch = 0 : i64, scratch_operands = 0 : i64, tpu.core_type = #tpu.core_type<tc>, window_params = [{transform_indices = @transform_0, window_bounds = array<i64: 1, 256, 512>}, {pipeline_mode = #tpu.pipeline_mode<synchronous>, transform_indices = @transform_1, window_bounds = array<i64: 256, 256>}, {pipeline_mode = #tpu.pipeline_mode<synchronous>, transform_indices = @transform_2, window_bounds = array<i64: 256, 1>}, {pipeline_mode = #tpu.pipeline_mode<synchronous>, transform_indices = @transform_3, window_bounds = array<i64: 32, 256>}, {pipeline_mode = #tpu.pipeline_mode<synchronous>, transform_indices = @transform_4, window_bounds = array<i64: 32, 1>}, {transform_indices = @transform_5, window_bounds = array<i64: 1, 32, 512>}]} {
    %c0 = arith.constant 0 : index
    %c0_0 = arith.constant 0 : index
    %c0_1 = arith.constant 0 : index
    %0 = vector.load %arg2[%c0, %c0_0, %c0_1] : memref<1x256x512xf32, #tpu.memory_space<vmem>>, vector<1x256x512xf32>
    %1 = vector.shape_cast %0 : vector<1x256x512xf32> to vector<256x512xf32>
    %2 = arith.truncf %1 : vector<256x512xf32> to vector<256x512xbf16>
    %c0_2 = arith.constant 0 : index
    %c0_3 = arith.constant 0 : index
    %3 = vector.load %arg3[%c0_2, %c0_3] : memref<256x256xbf16, #tpu.memory_space<vmem>>, vector<256x256xbf16>
    %cst = arith.constant dense<0.000000e+00> : vector<256x512xf32>
    %4 = tpu.matmul %3, %2, %cst {dimension_numbers = #tpu.dot_dimension_numbers<[1], [0], [0], [1], [0, 0, 1, 1], [], []>} : vector<256x256xbf16>, vector<256x512xbf16>, vector<256x512xf32> -> vector<256x512xf32>
    %c0_4 = arith.constant 0 : index
    %c0_5 = arith.constant 0 : index
    %5 = vector.load %arg4[%c0_4, %c0_5] : memref<256x1xf32, #tpu.memory_space<vmem>>, vector<256x1xf32>
    %6 = vector.broadcast %5 : vector<256x1xf32> to vector<256x512xf32>
    %7 = arith.addf %4, %6 : vector<256x512xf32>
    %cst_6 = arith.constant 0.000000e+00 : f32
    %8 = vector.broadcast %cst_6 : f32 to vector<256x512xf32>
    %9 = arith.maximumf %7, %8 : vector<256x512xf32>
    %c0_7 = arith.constant 0 : index
    %c0_8 = arith.constant 0 : index
    %10 = vector.load %arg5[%c0_7, %c0_8] : memref<32x256xbf16, #tpu.memory_space<vmem>>, vector<32x256xbf16>
    %11 = arith.truncf %9 : vector<256x512xf32> to vector<256x512xbf16>
    %cst_9 = arith.constant dense<0.000000e+00> : vector<32x512xf32>
    %12 = tpu.matmul %10, %11, %cst_9 {dimension_numbers = #tpu.dot_dimension_numbers<[1], [0], [0], [1], [0, 0, 1, 1], [], []>} : vector<32x256xbf16>, vector<256x512xbf16>, vector<32x512xf32> -> vector<32x512xf32>
    %c0_10 = arith.constant 0 : index
    %c0_11 = arith.constant 0 : index
    %13 = vector.load %arg6[%c0_10, %c0_11] : memref<32x1xf32, #tpu.memory_space<vmem>>, vector<32x1xf32>
    %14 = vector.broadcast %13 : vector<32x1xf32> to vector<32x512xf32>
    %15 = arith.addf %12, %14 : vector<32x512xf32>
    %c0_12 = arith.constant 0 : index
    %c0_13 = arith.constant 0 : index
    %c0_14 = arith.constant 0 : index
    %16 = vector.load %arg7[%c0_12, %c0_13, %c0_14] : memref<1x32x512xf32, #tpu.memory_space<vmem>>, vector<1x32x512xf32>
    %17 = vector.shape_cast %16 : vector<1x32x512xf32> to vector<32x512xf32>
    %18 = vector.shape_cast %15 : vector<32x512xf32> to vector<1x32x512xf32>
    tpu.vector_store %arg7[%c0_12, %c0_13, %c0_14], %18 {strides = array<i32>} : memref<1x32x512xf32, #tpu.memory_space<vmem>>, vector<1x32x512xf32>,
    return
  }
  func.func @transform_0(%arg0: i32, %arg1: i32) -> (i32, i32, i32) {
    %c0_i32 = arith.constant 0 : i32
    %c0_i32_0 = arith.constant 0 : i32
    return %arg0, %c0_i32, %arg1 : i32, i32, i32
  }
  func.func @transform_1(%arg0: i32, %arg1: i32) -> (i32, i32) {
    %c0_i32 = arith.constant 0 : i32
    %c0_i32_0 = arith.constant 0 : i32
    %c0_i32_1 = arith.constant 0 : i32
    return %c0_i32, %c0_i32_0 : i32, i32
  }
  func.func @transform_2(%arg0: i32, %arg1: i32) -> (i32, i32) {
    %c0_i32 = arith.constant 0 : i32
    %c0_i32_0 = arith.constant 0 : i32
    %c0_i32_1 = arith.constant 0 : i32
    return %c0_i32, %c0_i32_0 : i32, i32
  }
  func.func @transform_3(%arg0: i32, %arg1: i32) -> (i32, i32) {
    %c0_i32 = arith.constant 0 : i32
    %c0_i32_0 = arith.constant 0 : i32
    %c0_i32_1 = arith.constant 0 : i32
    return %c0_i32, %c0_i32_0 : i32, i32
  }
  func.func @transform_4(%arg0: i32, %arg1: i32) -> (i32, i32) {
    %c0_i32 = arith.constant 0 : i32
    %c0_i32_0 = arith.constant 0 : i32
    %c0_i32_1 = arith.constant 0 : i32
    return %c0_i32, %c0_i32_0 : i32, i32
  }
  func.func @transform_5(%arg0: i32, %arg1: i32) -> (i32, i32, i32) {
    %c0_i32 = arith.constant 0 : i32
    %c0_i32_0 = arith.constant 0 : i32
    return %arg0, %c0_i32, %arg1 : i32, i32, i32
  }
}

</mosaic_0001>

<llo_original>
// kernel: tpu_custom_call.1
$region0: #{tpu_custom_call.1}
  #allocation0 [shape = 'u32[]', space=smem, size = 0x4, offset = 0x4, fixed_abs, tag = 'smem constant byte address 0x4 - core index']
  #allocation1 [shape = 'u32[144,128]{1,0:T(1,128)}', space=vmem, size = 0x12000, scoped, tag = 'internal scratch']
  %s0 = inlined_call_operand.hbm [shape: f32[2,256,1024], index: 0, kind: input, shape index: {}]
  %s1 = inlined_call_operand.hbm [shape: bf16[256,256], index: 1, kind: input, shape index: {}]
  %s2 = inlined_call_operand.vmem [shape: f32[256,1], index: 2, kind: input, shape index: {}]
  %s3 = inlined_call_operand.hbm [shape: bf16[32,256], index: 3, kind: input, shape index: {}]
  %s4 = inlined_call_operand.vmem [shape: f32[32,1], index: 4, kind: input, shape index: {}]
  %s5 = inlined_call_operand.hbm [shape: f32[2,32,1024], index: 5, kind: output, shape index: {}]
  %s6 = sld [smem:[#allocation0]]
  $region65: #{tpu_custom_call.1} parent=0
    _
  %s8 = ssub.s32 1, %s6
  %s9 = scalar_select 0, %s8, %s6
  $region1: #{tpu_custom_call.1} parent=0
    #allocation2 [shape = 'u8[1048576]{0}', space=vmem, size = 0x100000, scoped, tag = 'input window, operand 0']
    #allocation3 [shape = 's32[2]{0}', space=sflag, size = 0x8, scoped, tag = 'scoped memory for tpu_custom_call.1']
    #allocation4 [shape = 's32[2]{0}', space=sflag, size = 0x8, scoped, tag = 'scoped memory for tpu_custom_call.1']
    #allocation5 [shape = 'u8[131072]{0}', space=vmem, size = 0x20000, scoped, tag = 'input window, operand 1, single buffered']
    #allocation6 [shape = 's32[1]{0}', space=sflag, size = 0x4, scoped, tag = 'scoped memory for tpu_custom_call.1']
    #allocation7 [shape = 'u8[16384]{0}', space=vmem, size = 0x4000, scoped, tag = 'input window, operand 3, single buffered']
    #allocation8 [shape = 'u8[131072]{0}', space=vmem, size = 0x20000, scoped, tag = 'output window, operand 0']
    %10 = vsyncpa [#allocation3], 0
    %s11 = scalar_lea.sflag [#allocation3], 1
    %12 = vsyncpa %s11, 0
    %13 = vsyncpa [#allocation6], 0
    %14 = vsyncpa [#allocation4], 0
    %s15 = scalar_lea.sflag [#allocation4], 1
    %16 = vsyncpa %s15, 0
    loop: start=0, step=1, limit=6
    $region2: #{tpu_custom_call.1} parent=1 // loop_pre_header
      _
    $region3: #{tpu_custom_call.1} parent=1 // loop_header
      %s18 = sphi 0, %s22
      %p19 = scmp.ge.s32.totalorder %s18, 6
      %s25 = sphi 0, %s37
      %s26 = sphi 0, %s33
      %s27 = sphi 0, %s25
      %s28 = sphi 0, %s26
      %s29 = sphi 0, %s27
      %s30 = sphi 0, %s28
      %s42 = sphi 0, %s44
      %s45 = sphi 0, %s42
      %s46 = sphi 0, %s45
      %s62 = sphi 0, %s46
      %s66 = sphi 0, %s66
      %s68 = sphi 0, %s66
      %s69 = sphi 0, %s68
      %s83 = sphi 0, %s69
      %s87 = sphi 0, %s87
      %s89 = sphi 0, %s87
      %s90 = sphi 0, %s89
      %s104 = sphi 0, %s90
      %s108 = sphi 0, %s108
      %s110 = sphi 0, %s108
      %s111 = sphi 0, %s110
      %s125 = sphi 0, %s111
      %s129 = sphi 0, %s129
      %s131 = sphi 0, %s129
      %s132 = sphi 0, %s131
      %s146 = sphi 0, %s132
      %s154 = sphi 0, %s156
      %s157 = sphi 0, %s154
      %s158 = sphi 0, %s157
      %s174 = sphi 0, %s158
    $region4: #{tpu_custom_call.1} parent=1 // loop_header_branch
      %21 = sbr.rel (%p19) target = $region8
    $region5: #{tpu_custom_call.1} parent=1 // loop_body
      %s23 = ssub.s32 %s18, 1
      %s24 = ssub.s32 %s18, 2
      %s31 = sadd.s32 1, %s26
      %p32 = scmp.ge.s32.totalorder %s31, 2
      %s33 = scalar_select %p32, 0, %s31
      %s34 = sadd.s32 1, %s25
      %s35 = scalar_select %p32, %s34, %s25
      %p36 = scmp.ge.s32.totalorder %s35, 2
      %s37 = scalar_select %p36, 0, %s35
      %s38 = ssub.s32 %s25, %s37
      %s39 = ssub.s32 %s26, %s33
      %s40 = sor.u32 %s38, %s39
      %p41 = scmp.eq.s32.totalorder %s40, 0
      %s43 = sadd.s32 %s42, 1
      %s44 = scalar_select %p41, %s42, %s43
      %p47 = pneg %p41
      %p48 = scmp.eq.s32.totalorder %s18, 3
      %p49 = por %p47, %p48
      %p50 = scmp.ne.s32.totalorder %s42, %s45
      %p51 = scmp.eq.s32.totalorder %s18, 0
      %p52 = por %p50, %p51
      %p53 = scmp.ne.s32.totalorder %s42, %s45
      %p54 = scmp.eq.s32.totalorder %s23, 3
      %p55 = por %p53, %p54
      %p56 = scmp.ne.s32.totalorder %s45, %s46
      %p57 = scmp.eq.s32.totalorder %s23, 0
      %p58 = por %p56, %p57
      %p59 = scmp.ne.s32.totalorder %s45, %s46
      %p60 = scmp.eq.s32.totalorder %s24, 3
      %p61 = por %p59, %p60
      %p63 = scmp.ne.s32.totalorder %s46, %s62
      %p64 = scmp.eq.s32.totalorder %s24, 0
      %p65 = por %p63, %p64
      %s67 = sadd.s32 %s66, 1
      %p70 = scmp.eq.s32.totalorder %s18, 3
      %p71 = scmp.ne.s32.totalorder %s66, %s68
      %p72 = scmp.eq.s32.totalorder %s18, 0
      %p73 = por %p71, %p72
      %p74 = scmp.ne.s32.totalorder %s66, %s68
      %p75 = scmp.eq.s32.totalorder %s23, 3
      %p76 = por %p74, %p75
      %p77 = scmp.ne.s32.totalorder %s68, %s69
      %p78 = scmp.eq.s32.totalorder %s23, 0
      %p79 = por %p77, %p78
      %p80 = scmp.ne.s32.totalorder %s68, %s69
      %p81 = scmp.eq.s32.totalorder %s24, 3
      %p82 = por %p80, %p81
      %p84 = scmp.ne.s32.totalorder %s69, %s83
      %p85 = scmp.eq.s32.totalorder %s24, 0
      %p86 = por %p84, %p85
      %s88 = sadd.s32 %s87, 1
      %p91 = scmp.eq.s32.totalorder %s18, 3
      %p92 = scmp.ne.s32.totalorder %s87, %s89
      %p93 = scmp.eq.s32.totalorder %s18, 0
      %p94 = por %p92, %p93
      %p95 = scmp.ne.s32.totalorder %s87, %s89
      %p96 = scmp.eq.s32.totalorder %s23, 3
      %p97 = por %p95, %p96
      %p98 = scmp.ne.s32.totalorder %s89, %s90
      %p99 = scmp.eq.s32.totalorder %s23, 0
      %p100 = por %p98, %p99
      %p101 = scmp.ne.s32.totalorder %s89, %s90
      %p102 = scmp.eq.s32.totalorder %s24, 3
      %p103 = por %p101, %p102
      %p105 = scmp.ne.s32.totalorder %s90, %s104
      %p106 = scmp.eq.s32.totalorder %s24, 0
      %p107 = por %p105, %p106
      %s109 = sadd.s32 %s108, 1
      %p112 = scmp.eq.s32.totalorder %s18, 3
      %p113 = scmp.ne.s32.totalorder %s108, %s110
      %p114 = scmp.eq.s32.totalorder %s18, 0
      %p115 = por %p113, %p114
      %p116 = scmp.ne.s32.totalorder %s108, %s110
      %p117 = scmp.eq.s32.totalorder %s23, 3
      %p118 = por %p116, %p117
      %p119 = scmp.ne.s32.totalorder %s110, %s111
      %p120 = scmp.eq.s32.totalorder %s23, 0
      %p121 = por %p119, %p120
      %p122 = scmp.ne.s32.totalorder %s110, %s111
      %p123 = scmp.eq.s32.totalorder %s24, 3
      %p124 = por %p122, %p123
      %p126 = scmp.ne.s32.totalorder %s111, %s125
      %p127 = scmp.eq.s32.totalorder %s24, 0
      %p128 = por %p126, %p127
      %s130 = sadd.s32 %s129, 1
      %p133 = scmp.eq.s32.totalorder %s18, 3
      %p134 = scmp.ne.s32.totalorder %s129, %s131
      %p135 = scmp.eq.s32.totalorder %s18, 0
      %p136 = por %p134, %p135
      %p137 = scmp.ne.s32.totalorder %s129, %s131
      %p138 = scmp.eq.s32.totalorder %s23, 3
      %p139 = por %p137, %p138
      %p140 = scmp.ne.s32.totalorder %s131, %s132
      %p141 = scmp.eq.s32.totalorder %s23, 0
      %p142 = por %p140, %p141
      %p143 = scmp.ne.s32.totalorder %s131, %s132
      %p144 = scmp.eq.s32.totalorder %s24, 3
      %p145 = por %p143, %p144
      %p147 = scmp.ne.s32.totalorder %s132, %s146
      %p148 = scmp.eq.s32.totalorder %s24, 0
      %p149 = por %p147, %p148
      %s150 = ssub.s32 %s25, %s37
      %s151 = ssub.s32 %s26, %s33
      %s152 = sor.u32 %s150, %s151
      %p153 = scmp.eq.s32.totalorder %s152, 0
      %s155 = sadd.s32 %s154, 1
      %s156 = scalar_select %p153, %s154, %s155
      %p159 = pneg %p153
      %p160 = scmp.eq.s32.totalorder %s18, 3
      %p161 = por %p159, %p160
      %p162 = scmp.ne.s32.totalorder %s154, %s157
      %p163 = scmp.eq.s32.totalorder %s18, 0
      %p164 = por %p162, %p163
      %p165 = scmp.ne.s32.totalorder %s154, %s157
      %p166 = scmp.eq.s32.totalorder %s23, 3
      %p167 = por %p165, %p166
      %p168 = scmp.ne.s32.totalorder %s157, %s158
      %p169 = scmp.eq.s32.totalorder %s23, 0
      %p170 = por %p168, %p169
      %p171 = scmp.ne.s32.totalorder %s157, %s158
      %p172 = scmp.eq.s32.totalorder %s24, 3
      %p173 = por %p171, %p172
      %p175 = scmp.ne.s32.totalorder %s158, %s174
      %p176 = scmp.eq.s32.totalorder %s24, 0
      %p177 = por %p175, %p176
      %p178 = scmp.le.s32.totalorder 1, %s18
      %p179 = scmp.lt.s32.totalorder %s18, 5
      %p180 = pnand %p178, %p179
      %p181 = pneg %p180
      // Predicated region
      $region9: #{tpu_custom_call.1} parent=5 // pred_check
        _
      $region10: #{tpu_custom_call.1} parent=5 // pred_check_branch
        %183 = sbr.rel (%p180) target = $region12
      $region11: #{tpu_custom_call.1} parent=5 // pred_region
        %s184 = ssub.s32 %s18, 1
        // Predicated region
        $region13: #{tpu_custom_call.1} parent=11 // pred_check
          %p185 = pneg %p79
        $region14: #{tpu_custom_call.1} parent=11 // pred_check_branch
          %187 = sbr.rel (%p185) target = $region16
        $region15: #{tpu_custom_call.1} parent=11 // pred_region
          %s189 = ssub.s32 4096, 4096
          %190 = vsyncadd [#allocation6], %s189
          %s191 = sshll.u32 [#allocation5], 4
          %s192 = int_to_ptr.vmem [resolvable:$true] %s191
          %197 = dma.hbm_to_vmem [thread:$0]  %s1, 4096, %s192, [#allocation6], 128, 128, 8
        $region16: #{tpu_custom_call.1} parent=11 // pred_fallthru
          _
        // Predicated region
        $region17: #{tpu_custom_call.1} parent=11 // pred_check
          %p198 = pneg %p100
        $region18: #{tpu_custom_call.1} parent=11 // pred_check_branch
          %200 = sbr.rel (%p198) target = $region20
        $region19: #{tpu_custom_call.1} parent=11 // pred_region
          _
        $region20: #{tpu_custom_call.1} parent=11 // pred_fallthru
          _
        // Predicated region
        $region21: #{tpu_custom_call.1} parent=11 // pred_check
          %p201 = pneg %p121
        $region22: #{tpu_custom_call.1} parent=11 // pred_check_branch
          %203 = sbr.rel (%p201) target = $region24
        $region23: #{tpu_custom_call.1} parent=11 // pred_region
          %s205 = ssub.s32 512, 512
          %206 = vsyncadd [#allocation6], %s205
          %s207 = sshll.u32 [#allocation7], 4
          %s208 = int_to_ptr.vmem [resolvable:$true] %s207
          %213 = dma.hbm_to_vmem [thread:$0]  %s3, 512, %s208, [#allocation6], 128, 128, 8
        $region24: #{tpu_custom_call.1} parent=11 // pred_fallthru
          _
        // Predicated region
        $region25: #{tpu_custom_call.1} parent=11 // pred_check
          %p214 = pneg %p142
        $region26: #{tpu_custom_call.1} parent=11 // pred_check_branch
          %216 = sbr.rel (%p214) target = $region28
        $region27: #{tpu_custom_call.1} parent=11 // pred_region
          _
        $region28: #{tpu_custom_call.1} parent=11 // pred_fallthru
          _
      $region12: #{tpu_custom_call.1} parent=5 // pred_fallthru
        _
      %p217 = scmp.lt.s32.totalorder %s18, 4
      // Predicated region
      $region29: #{tpu_custom_call.1} parent=5 // pred_check
        %p218 = pneg %p217
      $region30: #{tpu_custom_call.1} parent=5 // pred_check_branch
        %220 = sbr.rel (%p218) target = $region32
      $region31: #{tpu_custom_call.1} parent=5 // pred_region
        // Predicated region
        $region33: #{tpu_custom_call.1} parent=31 // pred_check
          %p221 = pneg %p52
        $region34: #{tpu_custom_call.1} parent=31 // pred_check_branch
          %223 = sbr.rel (%p221) target = $region36
        $region35: #{tpu_custom_call.1} parent=31 // pred_region
          %s224 = sand.u32 %s42, 1
          %s225 = scalar_lea.sflag [#allocation3], %s224
          %s226 = sand.u32 %s42, 1
          %s227 = smul.addr %s226, 1024
          %s228 = scalar_lea.vmem [#allocation2], %s227
          %s229 = smul.u32 4, %s26
          %s231 = ssub.s32 16384, 16384
          %232 = vsyncadd %s225, %s231
          %s233 = smul.addr %s25, 256
          %s234 = sadd.s32 %s229, %s233
          %s235 = smul.addr %s234, 128
          %s236 = scalar_lea.hbm %s0, %s235
          %s237 = sshll.u32 %s228, 4
          %s238 = int_to_ptr.vmem [resolvable:$true] %s237
          %243 = dma.hbm_to_vmem [thread:$0]  %s236, 16384, %s238, %s225, 1024, 512, 32
        $region36: #{tpu_custom_call.1} parent=31 // pred_fallthru
          _
      $region32: #{tpu_custom_call.1} parent=5 // pred_fallthru
        _
      %p244 = scmp.le.s32.totalorder 1, %s18
      %p245 = scmp.lt.s32.totalorder %s18, 5
      %p246 = pnand %p244, %p245
      %p247 = pneg %p246
      // Predicated region
      $region37: #{tpu_custom_call.1} parent=5 // pred_check
        _
      $region38: #{tpu_custom_call.1} parent=5 // pred_check_branch
        %249 = sbr.rel (%p246) target = $region40
      $region39: #{tpu_custom_call.1} parent=5 // pred_region
        %s250 = ssub.s32 %s18, 1
        %s251 = sand.u32 %s45, 1
        %s252 = scalar_lea.sflag [#allocation3], %s251
        %s253 = sand.u32 %s45, 1
        %s254 = smul.addr %s253, 1024
        %s255 = scalar_lea.vmem [#allocation2], %s254
        // Predicated region
        $region41: #{tpu_custom_call.1} parent=39 // pred_check
          %p256 = pneg %p58
        $region42: #{tpu_custom_call.1} parent=39 // pred_check_branch
          %258 = sbr.rel (%p256) target = $region44
        $region43: #{tpu_custom_call.1} parent=39 // pred_region
          %259 = dma.done %s252, 16384
        $region44: #{tpu_custom_call.1} parent=39 // pred_fallthru
          _
        // Predicated region
        $region45: #{tpu_custom_call.1} parent=39 // pred_check
          %p260 = pneg %p79
        $region46: #{tpu_custom_call.1} parent=39 // pred_check_branch
          %262 = sbr.rel (%p260) target = $region48
        $region47: #{tpu_custom_call.1} parent=39 // pred_region
          %263 = dma.done [#allocation6], 4096
        $region48: #{tpu_custom_call.1} parent=39 // pred_fallthru
          _
        // Predicated region
        $region49: #{tpu_custom_call.1} parent=39 // pred_check
          %p264 = pneg %p121
        $region50: #{tpu_custom_call.1} parent=39 // pred_check_branch
          %266 = sbr.rel (%p264) target = $region52
        $region51: #{tpu_custom_call.1} parent=39 // pred_region
          %267 = dma.done [#allocation6], 512
        $region52: #{tpu_custom_call.1} parent=39 // pred_fallthru
          _
        %s268 = sand.u32 %s45, 1
        %s269 = scalar_lea.sflag [#allocation3], %s268
        %s270 = sand.u32 %s45, 1
        %s271 = smul.addr %s270, 1024
        %s272 = scalar_lea.vmem [#allocation2], %s271
        %p273 = pneg %p58
        %p274 = pneg %p55
        %p275 = pneg %p79
        %p276 = pneg %p76
        %p277 = pneg %p100
        %p278 = pneg %p97
        %p279 = pneg %p121
        %p280 = pneg %p118
        %p281 = pneg %p142
        %p282 = pneg %p139
        %p283 = pneg %p170
        %p284 = pneg %p167
        %s285 = sand.u32 %s157, 1
        %s286 = scalar_lea.sflag [#allocation4], %s285
        %s287 = sand.u32 %s157, 1
        %s288 = smul.addr %s287, 128
        %s289 = scalar_lea.vmem [#allocation8], %s288
        %s290 = smul.u32 4, %s28
        %s291 = smul.u32 4, %s28
        %v292 = vld [vmem:[%s255] sm:$0xff]
        %v293 = vld [vmem:[%s255 + $0x8] sm:$0xff]
        %v294 = vld [vmem:[%s255 + $0x10] sm:$0xff]
        %v295 = vld [vmem:[%s255 + $0x18] sm:$0xff]
        %v296 = vld [vmem:[%s255 + $0x20] sm:$0xff]
        %v297 = vld [vmem:[%s255 + $0x28] sm:$0xff]
        %v298 = vld [vmem:[%s255 + $0x30] sm:$0xff]
        %v299 = vld [vmem:[%s255 + $0x38] sm:$0xff]
        %v300 = vld [vmem:[%s255 + $0x40] sm:$0xff]
        %v301 = vld [vmem:[%s255 + $0x48] sm:$0xff]
        %v302 = vld [vmem:[%s255 + $0x50] sm:$0xff]
        %v303 = vld [vmem:[%s255 + $0x58] sm:$0xff]
        %v304 = vld [vmem:[%s255 + $0x60] sm:$0xff]
        %v305 = vld [vmem:[%s255 + $0x68] sm:$0xff]
        %v306 = vld [vmem:[%s255 + $0x70] sm:$0xff]
        %v307 = vld [vmem:[%s255 + $0x78] sm:$0xff]
        %v308 = vld [vmem:[%s255 + $0x80] sm:$0xff]
        %v309 = vld [vmem:[%s255 + $0x88] sm:$0xff]
        %v310 = vld [vmem:[%s255 + $0x90] sm:$0xff]
        %v311 = vld [vmem:[%s255 + $0x98] sm:$0xff]
        %v312 = vld [vmem:[%s255 + $0xa0] sm:$0xff]
        %v313 = vld [vmem:[%s255 + $0xa8] sm:$0xff]
        %v314 = vld [vmem:[%s255 + $0xb0] sm:$0xff]
        %v315 = vld [vmem:[%s255 + $0xb8] sm:$0xff]
        %v316 = vld [vmem:[%s255 + $0xc0] sm:$0xff]
        %v317 = vld [vmem:[%s255 + $0xc8] sm:$0xff]
        %v318 = vld [vmem:[%s255 + $0xd0] sm:$0xff]
        %v319 = vld [vmem:[%s255 + $0xd8] sm:$0xff]
        %v320 = vld [vmem:[%s255 + $0xe0] sm:$0xff]
        %v321 = vld [vmem:[%s255 + $0xe8] sm:$0xff]
        %v322 = vld [vmem:[%s255 + $0xf0] sm:$0xff]
        %v323 = vld [vmem:[%s255 + $0xf8] sm:$0xff]
        %v324 = vld [vmem:[%s255 + $0x100] sm:$0xff]
        %v325 = vld [vmem:[%s255 + $0x108] sm:$0xff]
        %v326 = vld [vmem:[%s255 + $0x110] sm:$0xff]
        %v327 = vld [vmem:[%s255 + $0x118] sm:$0xff]
        %v328 = vld [vmem:[%s255 + $0x120] sm:$0xff]
        %v329 = vld [vmem:[%s255 + $0x128] sm:$0xff]
        %v330 = vld [vmem:[%s255 + $0x130] sm:$0xff]
        %v331 = vld [vmem:[%s255 + $0x138] sm:$0xff]
        %v332 = vld [vmem:[%s255 + $0x140] sm:$0xff]
        %v333 = vld [vmem:[%s255 + $0x148] sm:$0xff]
        %v334 = vld [vmem:[%s255 + $0x150] sm:$0xff]
        %v335 = vld [vmem:[%s255 + $0x158] sm:$0xff]
        %v336 = vld [vmem:[%s255 + $0x160] sm:$0xff]
        %v337 = vld [vmem:[%s255 + $0x168] sm:$0xff]
        %v338 = vld [vmem:[%s255 + $0x170] sm:$0xff]
        %v339 = vld [vmem:[%s255 + $0x178] sm:$0xff]
        %v340 = vld [vmem:[%s255 + $0x180] sm:$0xff]
        %v341 = vld [vmem:[%s255 + $0x188] sm:$0xff]
        %v342 = vld [vmem:[%s255 + $0x190] sm:$0xff]
        %v343 = vld [vmem:[%s255 + $0x198] sm:$0xff]
        %v344 = vld [vmem:[%s255 + $0x1a0] sm:$0xff]
        %v345 = vld [vmem:[%s255 + $0x1a8] sm:$0xff]
        %v346 = vld [vmem:[%s255 + $0x1b0] sm:$0xff]
        %v347 = vld [vmem:[%s255 + $0x1b8] sm:$0xff]
        %v348 = vld [vmem:[%s255 + $0x1c0] sm:$0xff]
        %v349 = vld [vmem:[%s255 + $0x1c8] sm:$0xff]
        %v350 = vld [vmem:[%s255 + $0x1d0] sm:$0xff]
        %v351 = vld [vmem:[%s255 + $0x1d8] sm:$0xff]
        %v352 = vld [vmem:[%s255 + $0x1e0] sm:$0xff]
        %v353 = vld [vmem:[%s255 + $0x1e8] sm:$0xff]
        %v354 = vld [vmem:[%s255 + $0x1f0] sm:$0xff]
        %v355 = vld [vmem:[%s255 + $0x1f8] sm:$0xff]
        %v356 = vld [vmem:[%s255 + $0x200] sm:$0xff]
        %v357 = vld [vmem:[%s255 + $0x208] sm:$0xff]
        %v358 = vld [vmem:[%s255 + $0x210] sm:$0xff]
        %v359 = vld [vmem:[%s255 + $0x218] sm:$0xff]
        %v360 = vld [vmem:[%s255 + $0x220] sm:$0xff]
        %v361 = vld [vmem:[%s255 + $0x228] sm:$0xff]
        %v362 = vld [vmem:[%s255 + $0x230] sm:$0xff]
        %v363 = vld [vmem:[%s255 + $0x238] sm:$0xff]
        %v364 = vld [vmem:[%s255 + $0x240] sm:$0xff]
        %v365 = vld [vmem:[%s255 + $0x248] sm:$0xff]
        %v366 = vld [vmem:[%s255 + $0x250] sm:$0xff]
        %v367 = vld [vmem:[%s255 + $0x258] sm:$0xff]
        %v368 = vld [vmem:[%s255 + $0x260] sm:$0xff]
        %v369 = vld [vmem:[%s255 + $0x268] sm:$0xff]
        %v370 = vld [vmem:[%s255 + $0x270] sm:$0xff]
        %v371 = vld [vmem:[%s255 + $0x278] sm:$0xff]
        %v372 = vld [vmem:[%s255 + $0x280] sm:$0xff]
        %v373 = vld [vmem:[%s255 + $0x288] sm:$0xff]
        %v374 = vld [vmem:[%s255 + $0x290] sm:$0xff]
        %v375 = vld [vmem:[%s255 + $0x298] sm:$0xff]
        %v376 = vld [vmem:[%s255 + $0x2a0] sm:$0xff]
        %v377 = vld [vmem:[%s255 + $0x2a8] sm:$0xff]
        %v378 = vld [vmem:[%s255 + $0x2b0] sm:$0xff]
        %v379 = vld [vmem:[%s255 + $0x2b8] sm:$0xff]
        %v380 = vld [vmem:[%s255 + $0x2c0] sm:$0xff]
        %v381 = vld [vmem:[%s255 + $0x2c8] sm:$0xff]
        %v382 = vld [vmem:[%s255 + $0x2d0] sm:$0xff]
        %v383 = vld [vmem:[%s255 + $0x2d8] sm:$0xff]
        %v384 = vld [vmem:[%s255 + $0x2e0] sm:$0xff]
        %v385 = vld [vmem:[%s255 + $0x2e8] sm:$0xff]
        %v386 = vld [vmem:[%s255 + $0x2f0] sm:$0xff]
        %v387 = vld [vmem:[%s255 + $0x2f8] sm:$0xff]
        %v388 = vld [vmem:[%s255 + $0x300] sm:$0xff]
        %v389 = vld [vmem:[%s255 + $0x308] sm:$0xff]
        %v390 = vld [vmem:[%s255 + $0x310] sm:$0xff]
        %v391 = vld [vmem:[%s255 + $0x318] sm:$0xff]
        %v392 = vld [vmem:[%s255 + $0x320] sm:$0xff]
        %v393 = vld [vmem:[%s255 + $0x328] sm:$0xff]
        %v394 = vld [vmem:[%s255 + $0x330] sm:$0xff]
        %v395 = vld [vmem:[%s255 + $0x338] sm:$0xff]
        %v396 = vld [vmem:[%s255 + $0x340] sm:$0xff]
        %v397 = vld [vmem:[%s255 + $0x348] sm:$0xff]
        %v398 = vld [vmem:[%s255 + $0x350] sm:$0xff]
        %v399 = vld [vmem:[%s255 + $0x358] sm:$0xff]
        %v400 = vld [vmem:[%s255 + $0x360] sm:$0xff]
        %v401 = vld [vmem:[%s255 + $0x368] sm:$0xff]
        %v402 = vld [vmem:[%s255 + $0x370] sm:$0xff]
        %v403 = vld [vmem:[%s255 + $0x378] sm:$0xff]
        %v404 = vld [vmem:[%s255 + $0x380] sm:$0xff]
        %v405 = vld [vmem:[%s255 + $0x388] sm:$0xff]
        %v406 = vld [vmem:[%s255 + $0x390] sm:$0xff]
        %v407 = vld [vmem:[%s255 + $0x398] sm:$0xff]
        %v408 = vld [vmem:[%s255 + $0x3a0] sm:$0xff]
        %v409 = vld [vmem:[%s255 + $0x3a8] sm:$0xff]
        %v410 = vld [vmem:[%s255 + $0x3b0] sm:$0xff]
        %v411 = vld [vmem:[%s255 + $0x3b8] sm:$0xff]
        %v412 = vld [vmem:[%s255 + $0x3c0] sm:$0xff]
        %v413 = vld [vmem:[%s255 + $0x3c8] sm:$0xff]
        %v414 = vld [vmem:[%s255 + $0x3d0] sm:$0xff]
        %v415 = vld [vmem:[%s255 + $0x3d8] sm:$0xff]
        %v416 = vld [vmem:[%s255 + $0x3e0] sm:$0xff]
        %v417 = vld [vmem:[%s255 + $0x3e8] sm:$0xff]
        %v418 = vld [vmem:[%s255 + $0x3f0] sm:$0xff]
        %v419 = vld [vmem:[%s255 + $0x3f8] sm:$0xff]
        %v420 = vpack.c.bf16 %v296, %v292
        %v421 = vpack.c.bf16 %v297, %v293
        %v422 = vpack.c.bf16 %v298, %v294
        %v423 = vpack.c.bf16 %v299, %v295
        %v424 = vpack.c.bf16 %v304, %v300
        %v425 = vpack.c.bf16 %v305, %v301
        %v426 = vpack.c.bf16 %v306, %v302
        %v427 = vpack.c.bf16 %v307, %v303
        %v428 = vpack.c.bf16 %v312, %v308
        %v429 = vpack.c.bf16 %v313, %v309
        %v430 = vpack.c.bf16 %v314, %v310
        %v431 = vpack.c.bf16 %v315, %v311
        %v432 = vpack.c.bf16 %v320, %v316
        %v433 = vpack.c.bf16 %v321, %v317
        %v434 = vpack.c.bf16 %v322, %v318
        %v435 = vpack.c.bf16 %v323, %v319
        %v436 = vpack.c.bf16 %v328, %v324
        %v437 = vpack.c.bf16 %v329, %v325
        %v438 = vpack.c.bf16 %v330, %v326
        %v439 = vpack.c.bf16 %v331, %v327
        %v440 = vpack.c.bf16 %v336, %v332
        %v441 = vpack.c.bf16 %v337, %v333
        %v442 = vpack.c.bf16 %v338, %v334
        %v443 = vpack.c.bf16 %v339, %v335
        %v444 = vpack.c.bf16 %v344, %v340
        %v445 = vpack.c.bf16 %v345, %v341
        %v446 = vpack.c.bf16 %v346, %v342
        %v447 = vpack.c.bf16 %v347, %v343
        %v448 = vpack.c.bf16 %v352, %v348
        %v449 = vpack.c.bf16 %v353, %v349
        %v450 = vpack.c.bf16 %v354, %v350
        %v451 = vpack.c.bf16 %v355, %v351
        %v452 = vpack.c.bf16 %v360, %v356
        %v453 = vpack.c.bf16 %v361, %v357
        %v454 = vpack.c.bf16 %v362, %v358
        %v455 = vpack.c.bf16 %v363, %v359
        %v456 = vpack.c.bf16 %v368, %v364
        %v457 = vpack.c.bf16 %v369, %v365
        %v458 = vpack.c.bf16 %v370, %v366
        %v459 = vpack.c.bf16 %v371, %v367
        %v460 = vpack.c.bf16 %v376, %v372
        %v461 = vpack.c.bf16 %v377, %v373
        %v462 = vpack.c.bf16 %v378, %v374
        %v463 = vpack.c.bf16 %v379, %v375
        %v464 = vpack.c.bf16 %v384, %v380
        %v465 = vpack.c.bf16 %v385, %v381
        %v466 = vpack.c.bf16 %v386, %v382
        %v467 = vpack.c.bf16 %v387, %v383
        %v468 = vpack.c.bf16 %v392, %v388
        %v469 = vpack.c.bf16 %v393, %v389
        %v470 = vpack.c.bf16 %v394, %v390
        %v471 = vpack.c.bf16 %v395, %v391
        %v472 = vpack.c.bf16 %v400, %v396
        %v473 = vpack.c.bf16 %v401, %v397
        %v474 = vpack.c.bf16 %v402, %v398
        %v475 = vpack.c.bf16 %v403, %v399
        %v476 = vpack.c.bf16 %v408, %v404
        %v477 = vpack.c.bf16 %v409, %v405
        %v478 = vpack.c.bf16 %v410, %v406
        %v479 = vpack.c.bf16 %v411, %v407
        %v480 = vpack.c.bf16 %v416, %v412
        %v481 = vpack.c.bf16 %v417, %v413
        %v482 = vpack.c.bf16 %v418, %v414
        %v483 = vpack.c.bf16 %v419, %v415
        %v484 = vld [vmem:[#allocation5] sm:$0xff]
        %v485 = vld [vmem:[#allocation5 + $0x8] sm:$0xff]
        %v486 = vld [vmem:[#allocation5 + $0x10] sm:$0xff]
        %v487 = vld [vmem:[#allocation5 + $0x18] sm:$0xff]
        %v488 = vld [vmem:[#allocation5 + $0x20] sm:$0xff]
        %v489 = vld [vmem:[#allocation5 + $0x28] sm:$0xff]
        %v490 = vld [vmem:[#allocation5 + $0x30] sm:$0xff]
        %v491 = vld [vmem:[#allocation5 + $0x38] sm:$0xff]
        %v492 = vld [vmem:[#allocation5 + $0x40] sm:$0xff]
        %v493 = vld [vmem:[#allocation5 + $0x48] sm:$0xff]
        %v494 = vld [vmem:[#allocation5 + $0x50] sm:$0xff]
        %v495 = vld [vmem:[#allocation5 + $0x58] sm:$0xff]
        %v496 = vld [vmem:[#allocation5 + $0x60] sm:$0xff]
        %v497 = vld [vmem:[#allocation5 + $0x68] sm:$0xff]
        %v498 = vld [vmem:[#allocation5 + $0x70] sm:$0xff]
        %v499 = vld [vmem:[#allocation5 + $0x78] sm:$0xff]
        %v500 = vld [vmem:[#allocation5 + $0x80] sm:$0xff]
        %v501 = vld [vmem:[#allocation5 + $0x88] sm:$0xff]
        %v502 = vld [vmem:[#allocation5 + $0x90] sm:$0xff]
        %v503 = vld [vmem:[#allocation5 + $0x98] sm:$0xff]
        %v504 = vld [vmem:[#allocation5 + $0xa0] sm:$0xff]
        %v505 = vld [vmem:[#allocation5 + $0xa8] sm:$0xff]
        %v506 = vld [vmem:[#allocation5 + $0xb0] sm:$0xff]
        %v507 = vld [vmem:[#allocation5 + $0xb8] sm:$0xff]
        %v508 = vld [vmem:[#allocation5 + $0xc0] sm:$0xff]
        %v509 = vld [vmem:[#allocation5 + $0xc8] sm:$0xff]
        %v510 = vld [vmem:[#allocation5 + $0xd0] sm:$0xff]
        %v511 = vld [vmem:[#allocation5 + $0xd8] sm:$0xff]
        %v512 = vld [vmem:[#allocation5 + $0xe0] sm:$0xff]
        %v513 = vld [vmem:[#allocation5 + $0xe8] sm:$0xff]
        %v514 = vld [vmem:[#allocation5 + $0xf0] sm:$0xff]
        %v515 = vld [vmem:[#allocation5 + $0xf8] sm:$0xff]
        %v516 = vld [vmem:[%s2] sm:$0xff]
        %v517 = vld [vmem:[%s2 + $0x8] sm:$0xff]
        %v518 = vld [vmem:[%s2 + $0x10] sm:$0xff]
        %v519 = vld [vmem:[%s2 + $0x18] sm:$0xff]
        %v520 = vld [vmem:[%s2 + $0x20] sm:$0xff]
        %v521 = vld [vmem:[%s2 + $0x28] sm:$0xff]
        %v522 = vld [vmem:[%s2 + $0x30] sm:$0xff]
        %v523 = vld [vmem:[%s2 + $0x38] sm:$0xff]
        %v524 = vld [vmem:[%s2 + $0x40] sm:$0xff]
        %v525 = vld [vmem:[%s2 + $0x48] sm:$0xff]
        %v526 = vld [vmem:[%s2 + $0x50] sm:$0xff]
        %v527 = vld [vmem:[%s2 + $0x58] sm:$0xff]
        %v528 = vld [vmem:[%s2 + $0x60] sm:$0xff]
        %v529 = vld [vmem:[%s2 + $0x68] sm:$0xff]
        %v530 = vld [vmem:[%s2 + $0x70] sm:$0xff]
        %v531 = vld [vmem:[%s2 + $0x78] sm:$0xff]
        %v532 = vld [vmem:[%s2 + $0x80] sm:$0xff]
        %v533 = vld [vmem:[%s2 + $0x88] sm:$0xff]
        %v534 = vld [vmem:[%s2 + $0x90] sm:$0xff]
        %v535 = vld [vmem:[%s2 + $0x98] sm:$0xff]
        %v536 = vld [vmem:[%s2 + $0xa0] sm:$0xff]
        %v537 = vld [vmem:[%s2 + $0xa8] sm:$0xff]
        %v538 = vld [vmem:[%s2 + $0xb0] sm:$0xff]
        %v539 = vld [vmem:[%s2 + $0xb8] sm:$0xff]
        %v540 = vld [vmem:[%s2 + $0xc0] sm:$0xff]
        %v541 = vld [vmem:[%s2 + $0xc8] sm:$0xff]
        %v542 = vld [vmem:[%s2 + $0xd0] sm:$0xff]
        %v543 = vld [vmem:[%s2 + $0xd8] sm:$0xff]
        %v544 = vld [vmem:[%s2 + $0xe0] sm:$0xff]
        %v545 = vld [vmem:[%s2 + $0xe8] sm:$0xff]
        %v546 = vld [vmem:[%s2 + $0xf0] sm:$0xff]
        %v547 = vld [vmem:[%s2 + $0xf8] sm:$0xff]
        %549 = vset.pattern.permute.xlu0 0
        %550 = vperm.xlu0 %549, %v516
        %v551 = vpop.permute.xlu0 %550
        %554 = vset.pattern.permute.xlu0 0
        %555 = vperm.xlu0 %554, %v517
        %v556 = vpop.permute.xlu0 %555
        %559 = vset.pattern.permute.xlu0 0
        %560 = vperm.xlu0 %559, %v518
        %v561 = vpop.permute.xlu0 %560
        %564 = vset.pattern.permute.xlu0 0
        %565 = vperm.xlu0 %564, %v519
        %v566 = vpop.permute.xlu0 %565
        %569 = vset.pattern.permute.xlu0 0
        %570 = vperm.xlu0 %569, %v520
        %v571 = vpop.permute.xlu0 %570
        %574 = vset.pattern.permute.xlu0 0
        %575 = vperm.xlu0 %574, %v521
        %v576 = vpop.permute.xlu0 %575
        %579 = vset.pattern.permute.xlu0 0
        %580 = vperm.xlu0 %579, %v522
        %v581 = vpop.permute.xlu0 %580
        %584 = vset.pattern.permute.xlu0 0
        %585 = vperm.xlu0 %584, %v523
        %v586 = vpop.permute.xlu0 %585
        %589 = vset.pattern.permute.xlu0 0
        %590 = vperm.xlu0 %589, %v524
        %v591 = vpop.permute.xlu0 %590
        %594 = vset.pattern.permute.xlu0 0
        %595 = vperm.xlu0 %594, %v525
        %v596 = vpop.permute.xlu0 %595
        %599 = vset.pattern.permute.xlu0 0
        %600 = vperm.xlu0 %599, %v526
        %v601 = vpop.permute.xlu0 %600
        %604 = vset.pattern.permute.xlu0 0
        %605 = vperm.xlu0 %604, %v527
        %v606 = vpop.permute.xlu0 %605
        %609 = vset.pattern.permute.xlu0 0
        %610 = vperm.xlu0 %609, %v528
        %v611 = vpop.permute.xlu0 %610
        %614 = vset.pattern.permute.xlu0 0
        %615 = vperm.xlu0 %614, %v529
        %v616 = vpop.permute.xlu0 %615
        %619 = vset.pattern.permute.xlu0 0
        %620 = vperm.xlu0 %619, %v530
        %v621 = vpop.permute.xlu0 %620
        %624 = vset.pattern.permute.xlu0 0
        %625 = vperm.xlu0 %624, %v531
        %v626 = vpop.permute.xlu0 %625
        %629 = vset.pattern.permute.xlu0 0
        %630 = vperm.xlu0 %629, %v532
        %v631 = vpop.permute.xlu0 %630
        %634 = vset.pattern.permute.xlu0 0
        %635 = vperm.xlu0 %634, %v533
        %v636 = vpop.permute.xlu0 %635
        %639 = vset.pattern.permute.xlu0 0
        %640 = vperm.xlu0 %639, %v534
        %v641 = vpop.permute.xlu0 %640
        %644 = vset.pattern.permute.xlu0 0
        %645 = vperm.xlu0 %644, %v535
        %v646 = vpop.permute.xlu0 %645
        %649 = vset.pattern.permute.xlu0 0
        %650 = vperm.xlu0 %649, %v536
        %v651 = vpop.permute.xlu0 %650
        %654 = vset.pattern.permute.xlu0 0
        %655 = vperm.xlu0 %654, %v537
        %v656 = vpop.permute.xlu0 %655
        %659 = vset.pattern.permute.xlu0 0
        %660 = vperm.xlu0 %659, %v538
        %v661 = vpop.permute.xlu0 %660
        %664 = vset.pattern.permute.xlu0 0
        %665 = vperm.xlu0 %664, %v539
        %v666 = vpop.permute.xlu0 %665
        %669 = vset.pattern.permute.xlu0 0
        %670 = vperm.xlu0 %669, %v540
        %v671 = vpop.permute.xlu0 %670
        %674 = vset.pattern.permute.xlu0 0
        %675 = vperm.xlu0 %674, %v541
        %v676 = vpop.permute.xlu0 %675
        %679 = vset.pattern.permute.xlu0 0
        %680 = vperm.xlu0 %679, %v542
        %v681 = vpop.permute.xlu0 %680
        %684 = vset.pattern.permute.xlu0 0
        %685 = vperm.xlu0 %684, %v543
        %v686 = vpop.permute.xlu0 %685
        %689 = vset.pattern.permute.xlu0 0
        %690 = vperm.xlu0 %689, %v544
        %v691 = vpop.permute.xlu0 %690
        %694 = vset.pattern.permute.xlu0 0
        %695 = vperm.xlu0 %694, %v545
        %v696 = vpop.permute.xlu0 %695
        %699 = vset.pattern.permute.xlu0 0
        %700 = vperm.xlu0 %699, %v546
        %v701 = vpop.permute.xlu0 %700
        %704 = vset.pattern.permute.xlu0 0
        %705 = vperm.xlu0 %704, %v547
        %v706 = vpop.permute.xlu0 %705
        %v740 = vunpack.c.l.b16 %v484
        %v741 = vunpack.c.h.b16 %v484
        %v742 = vunpack.c.l.b16 %v485
        %v743 = vunpack.c.h.b16 %v485
        %v744 = vunpack.c.l.b16 %v486
        %v745 = vunpack.c.h.b16 %v486
        %v746 = vunpack.c.l.b16 %v487
        %v747 = vunpack.c.h.b16 %v487
        %v748 = vunpack.c.l.b16 %v488
        %v749 = vunpack.c.h.b16 %v488
        %v750 = vunpack.c.l.b16 %v489
        %v751 = vunpack.c.h.b16 %v489
        %v752 = vunpack.c.l.b16 %v490
        %v753 = vunpack.c.h.b16 %v490
        %v754 = vunpack.c.l.b16 %v491
        %v755 = vunpack.c.h.b16 %v491
        %v756 = vunpack.c.l.b16 %v492
        %v757 = vunpack.c.h.b16 %v492
        %v758 = vunpack.c.l.b16 %v493
        %v759 = vunpack.c.h.b16 %v493
        %v760 = vunpack.c.l.b16 %v494
        %v761 = vunpack.c.h.b16 %v494
        %v762 = vunpack.c.l.b16 %v495
        %v763 = vunpack.c.h.b16 %v495
        %v764 = vunpack.c.l.b16 %v496
        %v765 = vunpack.c.h.b16 %v496
        %v766 = vunpack.c.l.b16 %v497
        %v767 = vunpack.c.h.b16 %v497
        %v768 = vunpack.c.l.b16 %v498
        %v769 = vunpack.c.h.b16 %v498
        %v770 = vunpack.c.l.b16 %v499
        %v771 = vunpack.c.h.b16 %v499
        %v772 = vunpack.c.l.b16 %v500
        %v773 = vunpack.c.h.b16 %v500
        %v774 = vunpack.c.l.b16 %v501
        %v775 = vunpack.c.h.b16 %v501
        %v776 = vunpack.c.l.b16 %v502
        %v777 = vunpack.c.h.b16 %v502
        %v778 = vunpack.c.l.b16 %v503
        %v779 = vunpack.c.h.b16 %v503
        %v780 = vunpack.c.l.b16 %v504
        %v781 = vunpack.c.h.b16 %v504
        %v782 = vunpack.c.l.b16 %v505
        %v783 = vunpack.c.h.b16 %v505
        %v784 = vunpack.c.l.b16 %v506
        %v785 = vunpack.c.h.b16 %v506
        %v786 = vunpack.c.l.b16 %v507
        %v787 = vunpack.c.h.b16 %v507
        %v788 = vunpack.c.l.b16 %v508
        %v789 = vunpack.c.h.b16 %v508
        %v790 = vunpack.c.l.b16 %v509
        %v791 = vunpack.c.h.b16 %v509
        %v792 = vunpack.c.l.b16 %v510
        %v793 = vunpack.c.h.b16 %v510
        %v794 = vunpack.c.l.b16 %v511
        %v795 = vunpack.c.h.b16 %v511
        %v796 = vunpack.c.l.b16 %v512
        %v797 = vunpack.c.h.b16 %v512
        %v798 = vunpack.c.l.b16 %v513
        %v799 = vunpack.c.h.b16 %v513
        %v800 = vunpack.c.l.b16 %v514
        %v801 = vunpack.c.h.b16 %v514
        %v802 = vunpack.c.l.b16 %v515
        %v803 = vunpack.c.h.b16 %v515
        %v804 = vpack.c.b16 %v742, %v740
        %v805 = vpack.c.b16 %v743, %v741
        %v806 = vpack.c.b16 %v746, %v744
        %v807 = vpack.c.b16 %v747, %v745
        %v808 = vpack.c.b16 %v750, %v748
        %v809 = vpack.c.b16 %v751, %v749
        %v810 = vpack.c.b16 %v754, %v752
        %v811 = vpack.c.b16 %v755, %v753
        %v812 = vpack.c.b16 %v758, %v756
        %v813 = vpack.c.b16 %v759, %v757
        %v814 = vpack.c.b16 %v762, %v760
        %v815 = vpack.c.b16 %v763, %v761
        %v816 = vpack.c.b16 %v766, %v764
        %v817 = vpack.c.b16 %v767, %v765
        %v818 = vpack.c.b16 %v770, %v768
        %v819 = vpack.c.b16 %v771, %v769
        %v820 = vpack.c.b16 %v774, %v772
        %v821 = vpack.c.b16 %v775, %v773
        %v822 = vpack.c.b16 %v778, %v776
        %v823 = vpack.c.b16 %v779, %v777
        %v824 = vpack.c.b16 %v782, %v780
        %v825 = vpack.c.b16 %v783, %v781
        %v826 = vpack.c.b16 %v786, %v784
        %v827 = vpack.c.b16 %v787, %v785
        %v828 = vpack.c.b16 %v790, %v788
        %v829 = vpack.c.b16 %v791, %v789
        %v830 = vpack.c.b16 %v794, %v792
        %v831 = vpack.c.b16 %v795, %v793
        %v832 = vpack.c.b16 %v798, %v796
        %v833 = vpack.c.b16 %v799, %v797
        %v834 = vpack.c.b16 %v802, %v800
        %v835 = vpack.c.b16 %v803, %v801
        %868 = vmatprep.subr.bf16.mxu0 %v449
        %869 = vmatpush1.bf16.msra.mxu0 %v448
        %870 = vmatprep.subr.bf16.mxu0 %v445
        %871 = vmatpush1.bf16.msra.mxu0 %v444
        %872 = vmatprep.subr.bf16.mxu0 %v441
        %873 = vmatpush1.bf16.msra.mxu0 %v440
        %874 = vmatprep.subr.bf16.mxu0 %v437
        %875 = vmatpush1.bf16.msra.mxu0 %v436
        %876 = vmatprep.subr.bf16.mxu0 %v433
        %877 = vmatpush1.bf16.msra.mxu0 %v432
        %878 = vmatprep.subr.bf16.mxu0 %v429
        %879 = vmatpush1.bf16.msra.mxu0 %v428
        %880 = vmatprep.subr.bf16.mxu0 %v425
        %881 = vmatpush1.bf16.msra.mxu0 %v424
        %882 = vmatprep.subr.bf16.mxu0 %v421
        %883 = vmatpush1.bf16.msra.mxu0 %v420
        %884 = vmatprep.subr.bf16.mxu0 %v481
        %885 = vmatpush2.bf16.msra.mxu0 %v480
        %886 = vmatprep.subr.bf16.mxu0 %v477
        %887 = vmatpush2.bf16.msra.mxu0 %v476
        %888 = vmatprep.subr.bf16.mxu0 %v473
        %889 = vmatpush2.bf16.msra.mxu0 %v472
        %890 = vmatprep.subr.bf16.mxu0 %v469
        %891 = vmatpush2.bf16.msra.mxu0 %v468
        %892 = vmatprep.subr.bf16.mxu0 %v465
        %893 = vmatpush2.bf16.msra.mxu0 %v464
        %894 = vmatprep.subr.bf16.mxu0 %v461
        %895 = vmatpush2.bf16.msra.mxu0 %v460
        %896 = vmatprep.subr.bf16.mxu0 %v457
        %897 = vmatpush2.bf16.msra.mxu0 %v456
        %898 = vmatprep.subr.bf16.mxu0 %v453
        %899 = vmatpush2.bf16.msra.mxu0 %v452
        %900 = vmatprep.mubr.bf16.mxu0 %v805
        %901 = vmatmul.mubr.bf16.gmra.mxu0 %v804
        %v902 = vpop.f32.mrf.mxu0
        %v903 = vadd.f32 %v551, %v902
        %v904 = vpop.f32.mrf.mxu0
        %v905 = vadd.f32 %v551, %v904
        %v906 = vpop.f32.mrf.mxu0
        %v907 = vadd.f32 %v556, %v906
        %v908 = vpop.f32.mrf.mxu0
        %v909 = vadd.f32 %v556, %v908
        %910 = vmatprep.mubr.bf16.mxu0 %v807
        %911 = vmatmul.mubr.bf16.gmra.mxu0 %v806
        %v912 = vpop.f32.mrf.mxu0
        %v913 = vadd.f32 %v561, %v912
        %v914 = vpop.f32.mrf.mxu0
        %v915 = vadd.f32 %v561, %v914
        %v916 = vpop.f32.mrf.mxu0
        %v917 = vadd.f32 %v566, %v916
        %v918 = vpop.f32.mrf.mxu0
        %v919 = vadd.f32 %v566, %v918
        %920 = vmatprep.mubr.bf16.mxu0 %v809
        %921 = vmatmul.mubr.bf16.gmra.mxu0 %v808
        %v922 = vpop.f32.mrf.mxu0
        %v923 = vadd.f32 %v571, %v922
        %v924 = vpop.f32.mrf.mxu0
        %v925 = vadd.f32 %v571, %v924
        %v926 = vpop.f32.mrf.mxu0
        %v927 = vadd.f32 %v576, %v926
        %v928 = vpop.f32.mrf.mxu0
        %v929 = vadd.f32 %v576, %v928
        %930 = vmatprep.mubr.bf16.mxu0 %v811
        %931 = vmatmul.mubr.bf16.gmra.mxu0 %v810
        %v932 = vpop.f32.mrf.mxu0
        %v933 = vadd.f32 %v581, %v932
        %v934 = vpop.f32.mrf.mxu0
        %v935 = vadd.f32 %v581, %v934
        %v936 = vpop.f32.mrf.mxu0
        %v937 = vadd.f32 %v586, %v936
        %v938 = vpop.f32.mrf.mxu0
        %v939 = vadd.f32 %v586, %v938
        %940 = vmatprep.mubr.bf16.mxu0 %v813
        %941 = vmatmul.mubr.bf16.gmra.mxu0 %v812
        %v942 = vpop.f32.mrf.mxu0
        %v943 = vadd.f32 %v591, %v942
        %v944 = vpop.f32.mrf.mxu0
        %v945 = vadd.f32 %v591, %v944
        %v946 = vpop.f32.mrf.mxu0
        %v947 = vadd.f32 %v596, %v946
        %v948 = vpop.f32.mrf.mxu0
        %v949 = vadd.f32 %v596, %v948
        %950 = vmatprep.mubr.bf16.mxu0 %v815
        %951 = vmatmul.mubr.bf16.gmra.mxu0 %v814
        %v952 = vpop.f32.mrf.mxu0
        %v953 = vadd.f32 %v601, %v952
        %v954 = vpop.f32.mrf.mxu0
        %v955 = vadd.f32 %v601, %v954
        %v956 = vpop.f32.mrf.mxu0
        %v957 = vadd.f32 %v606, %v956
        %v958 = vpop.f32.mrf.mxu0
        %v959 = vadd.f32 %v606, %v958
        %960 = vmatprep.mubr.bf16.mxu0 %v817
        %961 = vmatmul.mubr.bf16.gmra.mxu0 %v816
        %v962 = vpop.f32.mrf.mxu0
        %v963 = vadd.f32 %v611, %v962
        %v964 = vpop.f32.mrf.mxu0
        %v965 = vadd.f32 %v611, %v964
        %v966 = vpop.f32.mrf.mxu0
        %v967 = vadd.f32 %v616, %v966
        %v968 = vpop.f32.mrf.mxu0
        %v969 = vadd.f32 %v616, %v968
        %970 = vmatprep.mubr.bf16.mxu0 %v819
        %971 = vmatmul.mubr.bf16.gmra.mxu0 %v818
        %v972 = vpop.f32.mrf.mxu0
        %v973 = vadd.f32 %v621, %v972
        %v974 = vpop.f32.mrf.mxu0
        %v975 = vadd.f32 %v621, %v974
        %v976 = vpop.f32.mrf.mxu0
        %v977 = vadd.f32 %v626, %v976
        %v978 = vpop.f32.mrf.mxu0
        %v979 = vadd.f32 %v626, %v978
        %980 = vmatprep.mubr.bf16.mxu0 %v821
        %981 = vmatmul.mubr.bf16.gmra.mxu0 %v820
        %v982 = vpop.f32.mrf.mxu0
        %v983 = vadd.f32 %v631, %v982
        %v984 = vpop.f32.mrf.mxu0
        %v985 = vadd.f32 %v631, %v984
        %v986 = vpop.f32.mrf.mxu0
        %v987 = vadd.f32 %v636, %v986
        %v988 = vpop.f32.mrf.mxu0
        %v989 = vadd.f32 %v636, %v988
        %990 = vmatprep.mubr.bf16.mxu0 %v823
        %991 = vmatmul.mubr.bf16.gmra.mxu0 %v822
        %v992 = vpop.f32.mrf.mxu0
        %v993 = vadd.f32 %v641, %v992
        %v994 = vpop.f32.mrf.mxu0
        %v995 = vadd.f32 %v641, %v994
        %v996 = vpop.f32.mrf.mxu0
        %v997 = vadd.f32 %v646, %v996
        %v998 = vpop.f32.mrf.mxu0
        %v999 = vadd.f32 %v646, %v998
        %1000 = vmatprep.mubr.bf16.mxu0 %v825
        %1001 = vmatmul.mubr.bf16.gmra.mxu0 %v824
        %v1002 = vpop.f32.mrf.mxu0
        %v1003 = vadd.f32 %v651, %v1002
        %v1004 = vpop.f32.mrf.mxu0
        %v1005 = vadd.f32 %v651, %v1004
        %v1006 = vpop.f32.mrf.mxu0
        %v1007 = vadd.f32 %v656, %v1006
        %v1008 = vpop.f32.mrf.mxu0
        %v1009 = vadd.f32 %v656, %v1008
        %1010 = vmatprep.mubr.bf16.mxu0 %v827
        %1011 = vmatmul.mubr.bf16.gmra.mxu0 %v826
        %v1012 = vpop.f32.mrf.mxu0
        %v1013 = vadd.f32 %v661, %v1012
        %v1014 = vpop.f32.mrf.mxu0
        %v1015 = vadd.f32 %v661, %v1014
        %v1016 = vpop.f32.mrf.mxu0
        %v1017 = vadd.f32 %v666, %v1016
        %v1018 = vpop.f32.mrf.mxu0
        %v1019 = vadd.f32 %v666, %v1018
        %1020 = vmatprep.mubr.bf16.mxu0 %v829
        %1021 = vmatmul.mubr.bf16.gmra.mxu0 %v828
        %v1022 = vpop.f32.mrf.mxu0
        %v1023 = vadd.f32 %v671, %v1022
        %v1024 = vpop.f32.mrf.mxu0
        %v1025 = vadd.f32 %v671, %v1024
        %v1026 = vpop.f32.mrf.mxu0
        %v1027 = vadd.f32 %v676, %v1026
        %v1028 = vpop.f32.mrf.mxu0
        %v1029 = vadd.f32 %v676, %v1028
        %1030 = vmatprep.mubr.bf16.mxu0 %v831
        %1031 = vmatmul.mubr.bf16.gmra.mxu0 %v830
        %v1032 = vpop.f32.mrf.mxu0
        %v1033 = vadd.f32 %v681, %v1032
        %v1034 = vpop.f32.mrf.mxu0
        %v1035 = vadd.f32 %v681, %v1034
        %v1036 = vpop.f32.mrf.mxu0
        %v1037 = vadd.f32 %v686, %v1036
        %v1038 = vpop.f32.mrf.mxu0
        %v1039 = vadd.f32 %v686, %v1038
        %1040 = vmatprep.mubr.bf16.mxu0 %v833
        %1041 = vmatmul.mubr.bf16.gmra.mxu0 %v832
        %v1042 = vpop.f32.mrf.mxu0
        %v1043 = vadd.f32 %v691, %v1042
        %v1044 = vpop.f32.mrf.mxu0
        %v1045 = vadd.f32 %v691, %v1044
        %v1046 = vpop.f32.mrf.mxu0
        %v1047 = vadd.f32 %v696, %v1046
        %v1048 = vpop.f32.mrf.mxu0
        %v1049 = vadd.f32 %v696, %v1048
        %1050 = vmatprep.mubr.bf16.mxu0 %v835
        %1051 = vmatmul.mubr.bf16.gmra.mxu0 %v834
        %v1052 = vpop.f32.mrf.mxu0
        %v1053 = vadd.f32 %v701, %v1052
        %v1054 = vpop.f32.mrf.mxu0
        %v1055 = vadd.f32 %v701, %v1054
        %v1056 = vpop.f32.mrf.mxu0
        %v1057 = vadd.f32 %v706, %v1056
        %v1058 = vpop.f32.mrf.mxu0
        %v1059 = vadd.f32 %v706, %v1058
        %1060 = vdwg.mxu0
        %1061 = vmatprep.subr.bf16.mxu0 %v451
        %1062 = vmatpush1.bf16.msra.mxu0 %v450
        %1063 = vmatprep.subr.bf16.mxu0 %v447
        %1064 = vmatpush1.bf16.msra.mxu0 %v446
        %1065 = vmatprep.subr.bf16.mxu0 %v443
        %1066 = vmatpush1.bf16.msra.mxu0 %v442
        %1067 = vmatprep.subr.bf16.mxu0 %v439
        %1068 = vmatpush1.bf16.msra.mxu0 %v438
        %1069 = vmatprep.subr.bf16.mxu0 %v435
        %1070 = vmatpush1.bf16.msra.mxu0 %v434
        %1071 = vmatprep.subr.bf16.mxu0 %v431
        %1072 = vmatpush1.bf16.msra.mxu0 %v430
        %1073 = vmatprep.subr.bf16.mxu0 %v427
        %1074 = vmatpush1.bf16.msra.mxu0 %v426
        %1075 = vmatprep.subr.bf16.mxu0 %v423
        %1076 = vmatpush1.bf16.msra.mxu0 %v422
        %1077 = vmatprep.subr.bf16.mxu0 %v483
        %1078 = vmatpush2.bf16.msra.mxu0 %v482
        %1079 = vmatprep.subr.bf16.mxu0 %v479
        %1080 = vmatpush2.bf16.msra.mxu0 %v478
        %1081 = vmatprep.subr.bf16.mxu0 %v475
        %1082 = vmatpush2.bf16.msra.mxu0 %v474
        %1083 = vmatprep.subr.bf16.mxu0 %v471
        %1084 = vmatpush2.bf16.msra.mxu0 %v470
        %1085 = vmatprep.subr.bf16.mxu0 %v467
        %1086 = vmatpush2.bf16.msra.mxu0 %v466
        %1087 = vmatprep.subr.bf16.mxu0 %v463
        %1088 = vmatpush2.bf16.msra.mxu0 %v462
        %1089 = vmatprep.subr.bf16.mxu0 %v459
        %1090 = vmatpush2.bf16.msra.mxu0 %v458
        %1091 = vmatprep.subr.bf16.mxu0 %v455
        %1092 = vmatpush2.bf16.msra.mxu0 %v454
        %1093 = vmatprep.mubr.bf16.mxu0 %v805
        %1094 = vmatmul.mubr.bf16.gmra.mxu0 %v804
        %v1095 = vpop.f32.mrf.mxu0
        %v1096 = vadd.f32 %v551, %v1095
        %v1097 = vpop.f32.mrf.mxu0
        %v1098 = vadd.f32 %v551, %v1097
        %v1099 = vpop.f32.mrf.mxu0
        %v1100 = vadd.f32 %v556, %v1099
        %v1101 = vpop.f32.mrf.mxu0
        %v1102 = vadd.f32 %v556, %v1101
        %1103 = vmatprep.mubr.bf16.mxu0 %v807
        %1104 = vmatmul.mubr.bf16.gmra.mxu0 %v806
        %v1105 = vpop.f32.mrf.mxu0
        %v1106 = vadd.f32 %v561, %v1105
        %v1107 = vpop.f32.mrf.mxu0
        %v1108 = vadd.f32 %v561, %v1107
        %v1109 = vpop.f32.mrf.mxu0
        %v1110 = vadd.f32 %v566, %v1109
        %v1111 = vpop.f32.mrf.mxu0
        %v1112 = vadd.f32 %v566, %v1111
        %1113 = vmatprep.mubr.bf16.mxu0 %v809
        %1114 = vmatmul.mubr.bf16.gmra.mxu0 %v808
        %v1115 = vpop.f32.mrf.mxu0
        %v1116 = vadd.f32 %v571, %v1115
        %v1117 = vpop.f32.mrf.mxu0
        %v1118 = vadd.f32 %v571, %v1117
        %v1119 = vpop.f32.mrf.mxu0
        %v1120 = vadd.f32 %v576, %v1119
        %v1121 = vpop.f32.mrf.mxu0
        %v1122 = vadd.f32 %v576, %v1121
        %1123 = vmatprep.mubr.bf16.mxu0 %v811
        %1124 = vmatmul.mubr.bf16.gmra.mxu0 %v810
        %v1125 = vpop.f32.mrf.mxu0
        %v1126 = vadd.f32 %v581, %v1125
        %v1127 = vpop.f32.mrf.mxu0
        %v1128 = vadd.f32 %v581, %v1127
        %v1129 = vpop.f32.mrf.mxu0
        %v1130 = vadd.f32 %v586, %v1129
        %v1131 = vpop.f32.mrf.mxu0
        %v1132 = vadd.f32 %v586, %v1131
        %1133 = vmatprep.mubr.bf16.mxu0 %v813
        %1134 = vmatmul.mubr.bf16.gmra.mxu0 %v812
        %v1135 = vpop.f32.mrf.mxu0
        %v1136 = vadd.f32 %v591, %v1135
        %v1137 = vpop.f32.mrf.mxu0
        %v1138 = vadd.f32 %v591, %v1137
        %v1139 = vpop.f32.mrf.mxu0
        %v1140 = vadd.f32 %v596, %v1139
        %v1141 = vpop.f32.mrf.mxu0
        %v1142 = vadd.f32 %v596, %v1141
        %1143 = vmatprep.mubr.bf16.mxu0 %v815
        %1144 = vmatmul.mubr.bf16.gmra.mxu0 %v814
        %v1145 = vpop.f32.mrf.mxu0
        %v1146 = vadd.f32 %v601, %v1145
        %v1147 = vpop.f32.mrf.mxu0
        %v1148 = vadd.f32 %v601, %v1147
        %v1149 = vpop.f32.mrf.mxu0
        %v1150 = vadd.f32 %v606, %v1149
        %v1151 = vpop.f32.mrf.mxu0
        %v1152 = vadd.f32 %v606, %v1151
        %1153 = vmatprep.mubr.bf16.mxu0 %v817
        %1154 = vmatmul.mubr.bf16.gmra.mxu0 %v816
        %v1155 = vpop.f32.mrf.mxu0
        %v1156 = vadd.f32 %v611, %v1155
        %v1157 = vpop.f32.mrf.mxu0
        %v1158 = vadd.f32 %v611, %v1157
        %v1159 = vpop.f32.mrf.mxu0
        %v1160 = vadd.f32 %v616, %v1159
        %v1161 = vpop.f32.mrf.mxu0
        %v1162 = vadd.f32 %v616, %v1161
        %1163 = vmatprep.mubr.bf16.mxu0 %v819
        %1164 = vmatmul.mubr.bf16.gmra.mxu0 %v818
        %v1165 = vpop.f32.mrf.mxu0
        %v1166 = vadd.f32 %v621, %v1165
        %v1167 = vpop.f32.mrf.mxu0
        %v1168 = vadd.f32 %v621, %v1167
        %v1169 = vpop.f32.mrf.mxu0
        %v1170 = vadd.f32 %v626, %v1169
        %v1171 = vpop.f32.mrf.mxu0
        %v1172 = vadd.f32 %v626, %v1171
        %1173 = vmatprep.mubr.bf16.mxu0 %v821
        %1174 = vmatmul.mubr.bf16.gmra.mxu0 %v820
        %v1175 = vpop.f32.mrf.mxu0
        %v1176 = vadd.f32 %v631, %v1175
        %v1177 = vpop.f32.mrf.mxu0
        %v1178 = vadd.f32 %v631, %v1177
        %v1179 = vpop.f32.mrf.mxu0
        %v1180 = vadd.f32 %v636, %v1179
        %v1181 = vpop.f32.mrf.mxu0
        %v1182 = vadd.f32 %v636, %v1181
        %1183 = vmatprep.mubr.bf16.mxu0 %v823
        %1184 = vmatmul.mubr.bf16.gmra.mxu0 %v822
        %v1185 = vpop.f32.mrf.mxu0
        %v1186 = vadd.f32 %v641, %v1185
        %v1187 = vpop.f32.mrf.mxu0
        %v1188 = vadd.f32 %v641, %v1187
        %v1189 = vpop.f32.mrf.mxu0
        %v1190 = vadd.f32 %v646, %v1189
        %v1191 = vpop.f32.mrf.mxu0
        %v1192 = vadd.f32 %v646, %v1191
        %1193 = vmatprep.mubr.bf16.mxu0 %v825
        %1194 = vmatmul.mubr.bf16.gmra.mxu0 %v824
        %v1195 = vpop.f32.mrf.mxu0
        %v1196 = vadd.f32 %v651, %v1195
        %v1197 = vpop.f32.mrf.mxu0
        %v1198 = vadd.f32 %v651, %v1197
        %v1199 = vpop.f32.mrf.mxu0
        %v1200 = vadd.f32 %v656, %v1199
        %v1201 = vpop.f32.mrf.mxu0
        %v1202 = vadd.f32 %v656, %v1201
        %1203 = vmatprep.mubr.bf16.mxu0 %v827
        %1204 = vmatmul.mubr.bf16.gmra.mxu0 %v826
        %v1205 = vpop.f32.mrf.mxu0
        %v1206 = vadd.f32 %v661, %v1205
        %v1207 = vpop.f32.mrf.mxu0
        %v1208 = vadd.f32 %v661, %v1207
        %v1209 = vpop.f32.mrf.mxu0
        %v1210 = vadd.f32 %v666, %v1209
        %v1211 = vpop.f32.mrf.mxu0
        %v1212 = vadd.f32 %v666, %v1211
        %1213 = vmatprep.mubr.bf16.mxu0 %v829
        %1214 = vmatmul.mubr.bf16.gmra.mxu0 %v828
        %v1215 = vpop.f32.mrf.mxu0
        %v1216 = vadd.f32 %v671, %v1215
        %v1217 = vpop.f32.mrf.mxu0
        %v1218 = vadd.f32 %v671, %v1217
        %v1219 = vpop.f32.mrf.mxu0
        %v1220 = vadd.f32 %v676, %v1219
        %v1221 = vpop.f32.mrf.mxu0
        %v1222 = vadd.f32 %v676, %v1221
        %1223 = vmatprep.mubr.bf16.mxu0 %v831
        %1224 = vmatmul.mubr.bf16.gmra.mxu0 %v830
        %v1225 = vpop.f32.mrf.mxu0
        %v1226 = vadd.f32 %v681, %v1225
        %v1227 = vpop.f32.mrf.mxu0
        %v1228 = vadd.f32 %v681, %v1227
        %v1229 = vpop.f32.mrf.mxu0
        %v1230 = vadd.f32 %v686, %v1229
        %v1231 = vpop.f32.mrf.mxu0
        %v1232 = vadd.f32 %v686, %v1231
        %1233 = vmatprep.mubr.bf16.mxu0 %v833
        %1234 = vmatmul.mubr.bf16.gmra.mxu0 %v832
        %v1235 = vpop.f32.mrf.mxu0
        %v1236 = vadd.f32 %v691, %v1235
        %v1237 = vpop.f32.mrf.mxu0
        %v1238 = vadd.f32 %v691, %v1237
        %v1239 = vpop.f32.mrf.mxu0
        %v1240 = vadd.f32 %v696, %v1239
        %v1241 = vpop.f32.mrf.mxu0
        %v1242 = vadd.f32 %v696, %v1241
        %1243 = vmatprep.mubr.bf16.mxu0 %v835
        %1244 = vmatmul.mubr.bf16.gmra.mxu0 %v834
        %v1245 = vpop.f32.mrf.mxu0
        %v1246 = vadd.f32 %v701, %v1245
        %v1247 = vpop.f32.mrf.mxu0
        %v1248 = vadd.f32 %v701, %v1247
        %v1249 = vpop.f32.mrf.mxu0
        %v1250 = vadd.f32 %v706, %v1249
        %v1251 = vpop.f32.mrf.mxu0
        %v1252 = vadd.f32 %v706, %v1251
        %1253 = vdwg.mxu0
        %v1254 = vmax.f32 %v903, 0.0
        %v1255 = vmax.f32 %v905, 0.0
        %v1256 = vmax.f32 %v1096, 0.0
        %v1257 = vmax.f32 %v1098, 0.0
        %v1258 = vmax.f32 %v907, 0.0
        %v1259 = vmax.f32 %v909, 0.0
        %v1260 = vmax.f32 %v1100, 0.0
        %v1261 = vmax.f32 %v1102, 0.0
        %v1262 = vmax.f32 %v913, 0.0
        %v1263 = vmax.f32 %v915, 0.0
        %v1264 = vmax.f32 %v1106, 0.0
        %v1265 = vmax.f32 %v1108, 0.0
        %v1266 = vmax.f32 %v917, 0.0
        %v1267 = vmax.f32 %v919, 0.0
        %v1268 = vmax.f32 %v1110, 0.0
        %v1269 = vmax.f32 %v1112, 0.0
        %v1270 = vmax.f32 %v923, 0.0
        %v1271 = vmax.f32 %v925, 0.0
        %v1272 = vmax.f32 %v1116, 0.0
        %v1273 = vmax.f32 %v1118, 0.0
        %v1274 = vmax.f32 %v927, 0.0
        %v1275 = vmax.f32 %v929, 0.0
        %v1276 = vmax.f32 %v1120, 0.0
        %v1277 = vmax.f32 %v1122, 0.0
        %v1278 = vmax.f32 %v933, 0.0
        %v1279 = vmax.f32 %v935, 0.0
        %v1280 = vmax.f32 %v1126, 0.0
        %v1281 = vmax.f32 %v1128, 0.0
        %v1282 = vmax.f32 %v937, 0.0
        %v1283 = vmax.f32 %v939, 0.0
        %v1284 = vmax.f32 %v1130, 0.0
        %v1285 = vmax.f32 %v1132, 0.0
        %v1286 = vmax.f32 %v943, 0.0
        %v1287 = vmax.f32 %v945, 0.0
        %v1288 = vmax.f32 %v1136, 0.0
        %v1289 = vmax.f32 %v1138, 0.0
        %v1290 = vmax.f32 %v947, 0.0
        %v1291 = vmax.f32 %v949, 0.0
        %v1292 = vmax.f32 %v1140, 0.0
        %v1293 = vmax.f32 %v1142, 0.0
        %v1294 = vmax.f32 %v953, 0.0
        %v1295 = vmax.f32 %v955, 0.0
        %v1296 = vmax.f32 %v1146, 0.0
        %v1297 = vmax.f32 %v1148, 0.0
        %v1298 = vmax.f32 %v957, 0.0
        %v1299 = vmax.f32 %v959, 0.0
        %v1300 = vmax.f32 %v1150, 0.0
        %v1301 = vmax.f32 %v1152, 0.0
        %v1302 = vmax.f32 %v963, 0.0
        %v1303 = vmax.f32 %v965, 0.0
        %v1304 = vmax.f32 %v1156, 0.0
        %v1305 = vmax.f32 %v1158, 0.0
        %v1306 = vmax.f32 %v967, 0.0
        %v1307 = vmax.f32 %v969, 0.0
        %v1308 = vmax.f32 %v1160, 0.0
        %v1309 = vmax.f32 %v1162, 0.0
        %v1310 = vmax.f32 %v973, 0.0
        %v1311 = vmax.f32 %v975, 0.0
        %v1312 = vmax.f32 %v1166, 0.0
        %v1313 = vmax.f32 %v1168, 0.0
        %v1314 = vmax.f32 %v977, 0.0
        %v1315 = vmax.f32 %v979, 0.0
        %v1316 = vmax.f32 %v1170, 0.0
        %v1317 = vmax.f32 %v1172, 0.0
        %v1318 = vmax.f32 %v983, 0.0
        %v1319 = vmax.f32 %v985, 0.0
        %v1320 = vmax.f32 %v1176, 0.0
        %v1321 = vmax.f32 %v1178, 0.0
        %v1322 = vmax.f32 %v987, 0.0
        %v1323 = vmax.f32 %v989, 0.0
        %v1324 = vmax.f32 %v1180, 0.0
        %v1325 = vmax.f32 %v1182, 0.0
        %v1326 = vmax.f32 %v993, 0.0
        %v1327 = vmax.f32 %v995, 0.0
        %v1328 = vmax.f32 %v1186, 0.0
        %v1329 = vmax.f32 %v1188, 0.0
        %v1330 = vmax.f32 %v997, 0.0
        %v1331 = vmax.f32 %v999, 0.0
        %v1332 = vmax.f32 %v1190, 0.0
        %v1333 = vmax.f32 %v1192, 0.0
        %v1334 = vmax.f32 %v1003, 0.0
        %v1335 = vmax.f32 %v1005, 0.0
        %v1336 = vmax.f32 %v1196, 0.0
        %v1337 = vmax.f32 %v1198, 0.0
        %v1338 = vmax.f32 %v1007, 0.0
        %v1339 = vmax.f32 %v1009, 0.0
        %v1340 = vmax.f32 %v1200, 0.0
        %v1341 = vmax.f32 %v1202, 0.0
        %v1342 = vmax.f32 %v1013, 0.0
        %v1343 = vmax.f32 %v1015, 0.0
        %v1344 = vmax.f32 %v1206, 0.0
        %v1345 = vmax.f32 %v1208, 0.0
        %v1346 = vmax.f32 %v1017, 0.0
        %v1347 = vmax.f32 %v1019, 0.0
        %v1348 = vmax.f32 %v1210, 0.0
        %v1349 = vmax.f32 %v1212, 0.0
        %v1350 = vmax.f32 %v1023, 0.0
        %v1351 = vmax.f32 %v1025, 0.0
        %v1352 = vmax.f32 %v1216, 0.0
        %v1353 = vmax.f32 %v1218, 0.0
        %v1354 = vmax.f32 %v1027, 0.0
        %v1355 = vmax.f32 %v1029, 0.0
        %v1356 = vmax.f32 %v1220, 0.0
        %v1357 = vmax.f32 %v1222, 0.0
        %v1358 = vmax.f32 %v1033, 0.0
        %v1359 = vmax.f32 %v1035, 0.0
        %v1360 = vmax.f32 %v1226, 0.0
        %v1361 = vmax.f32 %v1228, 0.0
        %v1362 = vmax.f32 %v1037, 0.0
        %v1363 = vmax.f32 %v1039, 0.0
        %v1364 = vmax.f32 %v1230, 0.0
        %v1365 = vmax.f32 %v1232, 0.0
        %v1366 = vmax.f32 %v1043, 0.0
        %v1367 = vmax.f32 %v1045, 0.0
        %v1368 = vmax.f32 %v1236, 0.0
        %v1369 = vmax.f32 %v1238, 0.0
        %v1370 = vmax.f32 %v1047, 0.0
        %v1371 = vmax.f32 %v1049, 0.0
        %v1372 = vmax.f32 %v1240, 0.0
        %v1373 = vmax.f32 %v1242, 0.0
        %v1374 = vmax.f32 %v1053, 0.0
        %v1375 = vmax.f32 %v1055, 0.0
        %v1376 = vmax.f32 %v1246, 0.0
        %v1377 = vmax.f32 %v1248, 0.0
        %v1378 = vmax.f32 %v1057, 0.0
        %v1379 = vmax.f32 %v1059, 0.0
        %v1380 = vmax.f32 %v1250, 0.0
        %v1381 = vmax.f32 %v1252, 0.0
        %v1382 = vld [vmem:[#allocation7] sm:$0xff]
        %v1383 = vld [vmem:[#allocation7 + $0x8] sm:$0xff]
        %v1384 = vld [vmem:[#allocation7 + $0x10] sm:$0xff]
        %v1385 = vld [vmem:[#allocation7 + $0x18] sm:$0xff]
        %v1386 = vpack.c.bf16 %v1258, %v1254
        %v1387 = vpack.c.bf16 %v1259, %v1255
        %v1388 = vpack.c.bf16 %v1260, %v1256
        %v1389 = vpack.c.bf16 %v1261, %v1257
        %v1390 = vpack.c.bf16 %v1266, %v1262
        %v1391 = vpack.c.bf16 %v1267, %v1263
        %v1392 = vpack.c.bf16 %v1268, %v1264
        %v1393 = vpack.c.bf16 %v1269, %v1265
        %v1394 = vpack.c.bf16 %v1274, %v1270
        %v1395 = vpack.c.bf16 %v1275, %v1271
        %v1396 = vpack.c.bf16 %v1276, %v1272
        %v1397 = vpack.c.bf16 %v1277, %v1273
        %v1398 = vpack.c.bf16 %v1282, %v1278
        %v1399 = vpack.c.bf16 %v1283, %v1279
        %v1400 = vpack.c.bf16 %v1284, %v1280
        %v1401 = vpack.c.bf16 %v1285, %v1281
        %v1402 = vpack.c.bf16 %v1290, %v1286
        %v1403 = vpack.c.bf16 %v1291, %v1287
        %v1404 = vpack.c.bf16 %v1292, %v1288
        %v1405 = vpack.c.bf16 %v1293, %v1289
        %v1406 = vpack.c.bf16 %v1298, %v1294
        %v1407 = vpack.c.bf16 %v1299, %v1295
        %v1408 = vpack.c.bf16 %v1300, %v1296
        %v1409 = vpack.c.bf16 %v1301, %v1297
        %v1410 = vpack.c.bf16 %v1306, %v1302
        %v1411 = vpack.c.bf16 %v1307, %v1303
        %v1412 = vpack.c.bf16 %v1308, %v1304
        %v1413 = vpack.c.bf16 %v1309, %v1305
        %v1414 = vpack.c.bf16 %v1314, %v1310
        %v1415 = vpack.c.bf16 %v1315, %v1311
        %v1416 = vpack.c.bf16 %v1316, %v1312
        %v1417 = vpack.c.bf16 %v1317, %v1313
        %v1418 = vpack.c.bf16 %v1322, %v1318
        %v1419 = vpack.c.bf16 %v1323, %v1319
        %v1420 = vpack.c.bf16 %v1324, %v1320
        %v1421 = vpack.c.bf16 %v1325, %v1321
        %v1422 = vpack.c.bf16 %v1330, %v1326
        %v1423 = vpack.c.bf16 %v1331, %v1327
        %v1424 = vpack.c.bf16 %v1332, %v1328
        %v1425 = vpack.c.bf16 %v1333, %v1329
        %v1426 = vpack.c.bf16 %v1338, %v1334
        %v1427 = vpack.c.bf16 %v1339, %v1335
        %v1428 = vpack.c.bf16 %v1340, %v1336
        %v1429 = vpack.c.bf16 %v1341, %v1337
        %v1430 = vpack.c.bf16 %v1346, %v1342
        %v1431 = vpack.c.bf16 %v1347, %v1343
        %v1432 = vpack.c.bf16 %v1348, %v1344
        %v1433 = vpack.c.bf16 %v1349, %v1345
        %v1434 = vpack.c.bf16 %v1354, %v1350
        %v1435 = vpack.c.bf16 %v1355, %v1351
        %v1436 = vpack.c.bf16 %v1356, %v1352
        %v1437 = vpack.c.bf16 %v1357, %v1353
        %v1438 = vpack.c.bf16 %v1362, %v1358
        %v1439 = vpack.c.bf16 %v1363, %v1359
        %v1440 = vpack.c.bf16 %v1364, %v1360
        %v1441 = vpack.c.bf16 %v1365, %v1361
        %v1442 = vpack.c.bf16 %v1370, %v1366
        %v1443 = vpack.c.bf16 %v1371, %v1367
        %v1444 = vpack.c.bf16 %v1372, %v1368
        %v1445 = vpack.c.bf16 %v1373, %v1369
        %v1446 = vpack.c.bf16 %v1378, %v1374
        %v1447 = vpack.c.bf16 %v1379, %v1375
        %v1448 = vpack.c.bf16 %v1380, %v1376
        %v1449 = vpack.c.bf16 %v1381, %v1377
        %v1450 = vld [vmem:[%s4] sm:$0xff]
        %v1451 = vld [vmem:[%s4 + $0x8] sm:$0xff]
        %v1452 = vld [vmem:[%s4 + $0x10] sm:$0xff]
        %v1453 = vld [vmem:[%s4 + $0x18] sm:$0xff]
        %1455 = vset.pattern.permute.xlu0 0
        %1456 = vperm.xlu0 %1455, %v1450
        %v1457 = vpop.permute.xlu0 %1456
        %1460 = vset.pattern.permute.xlu0 0
        %1461 = vperm.xlu0 %1460, %v1451
        %v1462 = vpop.permute.xlu0 %1461
        %1465 = vset.pattern.permute.xlu0 0
        %1466 = vperm.xlu0 %1465, %v1452
        %v1467 = vpop.permute.xlu0 %1466
        %1470 = vset.pattern.permute.xlu0 0
        %1471 = vperm.xlu0 %1470, %v1453
        %v1472 = vpop.permute.xlu0 %1471
        %v1478 = vunpack.c.l.b16 %v1382
        %v1479 = vunpack.c.h.b16 %v1382
        %v1480 = vunpack.c.l.b16 %v1383
        %v1481 = vunpack.c.h.b16 %v1383
        %v1482 = vunpack.c.l.b16 %v1384
        %v1483 = vunpack.c.h.b16 %v1384
        %v1484 = vunpack.c.l.b16 %v1385
        %v1485 = vunpack.c.h.b16 %v1385
        %v1486 = vpack.c.b16 %v1480, %v1478
        %v1487 = vpack.c.b16 %v1481, %v1479
        %v1488 = vpack.c.b16 %v1484, %v1482
        %v1489 = vpack.c.b16 %v1485, %v1483
        %1494 = vmatprep.subr.bf16.mxu0 %v1415
        %1495 = vmatpush1.bf16.msra.mxu0 %v1414
        %1496 = vmatprep.subr.bf16.mxu0 %v1411
        %1497 = vmatpush1.bf16.msra.mxu0 %v1410
        %1498 = vmatprep.subr.bf16.mxu0 %v1407
        %1499 = vmatpush1.bf16.msra.mxu0 %v1406
        %1500 = vmatprep.subr.bf16.mxu0 %v1403
        %1501 = vmatpush1.bf16.msra.mxu0 %v1402
        %1502 = vmatprep.subr.bf16.mxu0 %v1399
        %1503 = vmatpush1.bf16.msra.mxu0 %v1398
        %1504 = vmatprep.subr.bf16.mxu0 %v1395
        %1505 = vmatpush1.bf16.msra.mxu0 %v1394
        %1506 = vmatprep.subr.bf16.mxu0 %v1391
        %1507 = vmatpush1.bf16.msra.mxu0 %v1390
        %1508 = vmatprep.subr.bf16.mxu0 %v1387
        %1509 = vmatpush1.bf16.msra.mxu0 %v1386
        %1510 = vmatprep.subr.bf16.mxu0 %v1447
        %1511 = vmatpush2.bf16.msra.mxu0 %v1446
        %1512 = vmatprep.subr.bf16.mxu0 %v1443
        %1513 = vmatpush2.bf16.msra.mxu0 %v1442
        %1514 = vmatprep.subr.bf16.mxu0 %v1439
        %1515 = vmatpush2.bf16.msra.mxu0 %v1438
        %1516 = vmatprep.subr.bf16.mxu0 %v1435
        %1517 = vmatpush2.bf16.msra.mxu0 %v1434
        %1518 = vmatprep.subr.bf16.mxu0 %v1431
        %1519 = vmatpush2.bf16.msra.mxu0 %v1430
        %1520 = vmatprep.subr.bf16.mxu0 %v1427
        %1521 = vmatpush2.bf16.msra.mxu0 %v1426
        %1522 = vmatprep.subr.bf16.mxu0 %v1423
        %1523 = vmatpush2.bf16.msra.mxu0 %v1422
        %1524 = vmatprep.subr.bf16.mxu0 %v1419
        %1525 = vmatpush2.bf16.msra.mxu0 %v1418
        %1526 = vmatprep.mubr.bf16.mxu0 %v1487
        %1527 = vmatmul.mubr.bf16.gmra.mxu0 %v1486
        %v1528 = vpop.f32.mrf.mxu0
        %v1529 = vadd.f32 %v1457, %v1528
        %v1530 = vpop.f32.mrf.mxu0
        %v1531 = vadd.f32 %v1457, %v1530
        %v1532 = vpop.f32.mrf.mxu0
        %v1533 = vadd.f32 %v1462, %v1532
        %v1534 = vpop.f32.mrf.mxu0
        %v1535 = vadd.f32 %v1462, %v1534
        %1536 = vmatprep.mubr.bf16.mxu0 %v1489
        %1537 = vmatmul.mubr.bf16.gmra.mxu0 %v1488
        %v1538 = vpop.f32.mrf.mxu0
        %v1539 = vadd.f32 %v1467, %v1538
        %v1540 = vpop.f32.mrf.mxu0
        %v1541 = vadd.f32 %v1467, %v1540
        %v1542 = vpop.f32.mrf.mxu0
        %v1543 = vadd.f32 %v1472, %v1542
        %v1544 = vpop.f32.mrf.mxu0
        %v1545 = vadd.f32 %v1472, %v1544
        %1546 = vdwg.mxu0
        %1547 = vmatprep.subr.bf16.mxu0 %v1417
        %1548 = vmatpush1.bf16.msra.mxu0 %v1416
        %1549 = vmatprep.subr.bf16.mxu0 %v1413
        %1550 = vmatpush1.bf16.msra.mxu0 %v1412
        %1551 = vmatprep.subr.bf16.mxu0 %v1409
        %1552 = vmatpush1.bf16.msra.mxu0 %v1408
        %1553 = vmatprep.subr.bf16.mxu0 %v1405
        %1554 = vmatpush1.bf16.msra.mxu0 %v1404
        %1555 = vmatprep.subr.bf16.mxu0 %v1401
        %1556 = vmatpush1.bf16.msra.mxu0 %v1400
        %1557 = vmatprep.subr.bf16.mxu0 %v1397
        %1558 = vmatpush1.bf16.msra.mxu0 %v1396
        %1559 = vmatprep.subr.bf16.mxu0 %v1393
        %1560 = vmatpush1.bf16.msra.mxu0 %v1392
        %1561 = vmatprep.subr.bf16.mxu0 %v1389
        %1562 = vmatpush1.bf16.msra.mxu0 %v1388
        %1563 = vmatprep.subr.bf16.mxu0 %v1449
        %1564 = vmatpush2.bf16.msra.mxu0 %v1448
        %1565 = vmatprep.subr.bf16.mxu0 %v1445
        %1566 = vmatpush2.bf16.msra.mxu0 %v1444
        %1567 = vmatprep.subr.bf16.mxu0 %v1441
        %1568 = vmatpush2.bf16.msra.mxu0 %v1440
        %1569 = vmatprep.subr.bf16.mxu0 %v1437
        %1570 = vmatpush2.bf16.msra.mxu0 %v1436
        %1571 = vmatprep.subr.bf16.mxu0 %v1433
        %1572 = vmatpush2.bf16.msra.mxu0 %v1432
        %1573 = vmatprep.subr.bf16.mxu0 %v1429
        %1574 = vmatpush2.bf16.msra.mxu0 %v1428
        %1575 = vmatprep.subr.bf16.mxu0 %v1425
        %1576 = vmatpush2.bf16.msra.mxu0 %v1424
        %1577 = vmatprep.subr.bf16.mxu0 %v1421
        %1578 = vmatpush2.bf16.msra.mxu0 %v1420
        %1579 = vmatprep.mubr.bf16.mxu0 %v1487
        %1580 = vmatmul.mubr.bf16.gmra.mxu0 %v1486
        %v1581 = vpop.f32.mrf.mxu0
        %v1582 = vadd.f32 %v1457, %v1581
        %v1583 = vpop.f32.mrf.mxu0
        %v1584 = vadd.f32 %v1457, %v1583
        %v1585 = vpop.f32.mrf.mxu0
        %v1586 = vadd.f32 %v1462, %v1585
        %v1587 = vpop.f32.mrf.mxu0
        %v1588 = vadd.f32 %v1462, %v1587
        %1589 = vmatprep.mubr.bf16.mxu0 %v1489
        %1590 = vmatmul.mubr.bf16.gmra.mxu0 %v1488
        %v1591 = vpop.f32.mrf.mxu0
        %v1592 = vadd.f32 %v1467, %v1591
        %v1593 = vpop.f32.mrf.mxu0
        %v1594 = vadd.f32 %v1467, %v1593
        %v1595 = vpop.f32.mrf.mxu0
        %v1596 = vadd.f32 %v1472, %v1595
        %v1597 = vpop.f32.mrf.mxu0
        %v1598 = vadd.f32 %v1472, %v1597
        %1599 = vdwg.mxu0
        %1600 = vst [vmem:[%s289] sm:$0xff] %v1529
        %1601 = vst [vmem:[%s289 + $0x8] sm:$0xff] %v1531
        %1602 = vst [vmem:[%s289 + $0x10] sm:$0xff] %v1582
        %1603 = vst [vmem:[%s289 + $0x18] sm:$0xff] %v1584
        %1604 = vst [vmem:[%s289 + $0x20] sm:$0xff] %v1533
        %1605 = vst [vmem:[%s289 + $0x28] sm:$0xff] %v1535
        %1606 = vst [vmem:[%s289 + $0x30] sm:$0xff] %v1586
        %1607 = vst [vmem:[%s289 + $0x38] sm:$0xff] %v1588
        %1608 = vst [vmem:[%s289 + $0x40] sm:$0xff] %v1539
        %1609 = vst [vmem:[%s289 + $0x48] sm:$0xff] %v1541
        %1610 = vst [vmem:[%s289 + $0x50] sm:$0xff] %v1592
        %1611 = vst [vmem:[%s289 + $0x58] sm:$0xff] %v1594
        %1612 = vst [vmem:[%s289 + $0x60] sm:$0xff] %v1543
        %1613 = vst [vmem:[%s289 + $0x68] sm:$0xff] %v1545
        %1614 = vst [vmem:[%s289 + $0x70] sm:$0xff] %v1596
        %1615 = vst [vmem:[%s289 + $0x78] sm:$0xff] %v1598
        %s1616 = sand.u32 %s157, 1
        %s1617 = scalar_lea.sflag [#allocation4], %s1616
        %s1618 = sand.u32 %s157, 1
        %s1619 = smul.addr %s1618, 128
        %s1620 = scalar_lea.vmem [#allocation8], %s1619
        // Predicated region
        $region53: #{tpu_custom_call.1} parent=39 // pred_check
          %p1621 = pneg %p167
        $region54: #{tpu_custom_call.1} parent=39 // pred_check_branch
          %1623 = sbr.rel (%p1621) target = $region56
        $region55: #{tpu_custom_call.1} parent=39 // pred_region
          %s1624 = smul.u32 4, %s28
          %s1626 = ssub.s32 2048, 2048
          %1627 = vsyncadd %s1617, %s1626
          %s1628 = smul.addr %s27, 32
          %s1629 = sadd.s32 %s1624, %s1628
          %s1630 = smul.addr %s1629, 128
          %s1631 = scalar_lea.hbm %s5, %s1630
          %s1632 = sshll.u32 %s1620, 4
          %s1633 = int_to_ptr.vmem [resolvable:$true] %s1632
          %1638 = dma.vmem_to_hbm [thread:$0]  %s1633, 2048, %s1631, %s1617, 512, 1024, 32
        $region56: #{tpu_custom_call.1} parent=39 // pred_fallthru
          _
      $region40: #{tpu_custom_call.1} parent=5 // pred_fallthru
        _
      %p1639 = scmp.le.s32.totalorder 2, %s18
      // Predicated region
      $region57: #{tpu_custom_call.1} parent=5 // pred_check
        %p1640 = pneg %p1639
      $region58: #{tpu_custom_call.1} parent=5 // pred_check_branch
        %1642 = sbr.rel (%p1640) target = $region60
      $region59: #{tpu_custom_call.1} parent=5 // pred_region
        %s1643 = ssub.s32 %s18, 2
        // Predicated region
        $region61: #{tpu_custom_call.1} parent=59 // pred_check
          %p1644 = pneg %p173
        $region62: #{tpu_custom_call.1} parent=59 // pred_check_branch
          %1646 = sbr.rel (%p1644) target = $region64
        $region63: #{tpu_custom_call.1} parent=59 // pred_region
          %s1647 = sand.u32 %s158, 1
          %s1648 = scalar_lea.sflag [#allocation4], %s1647
          %s1649 = sand.u32 %s158, 1
          %s1650 = smul.addr %s1649, 128
          %s1651 = scalar_lea.vmem [#allocation8], %s1650
          %1652 = dma.done %s1648, 2048
        $region64: #{tpu_custom_call.1} parent=59 // pred_fallthru
          _
      $region60: #{tpu_custom_call.1} parent=5 // pred_fallthru
        _
    $region6: #{tpu_custom_call.1} parent=1 // loop_footer
      %s22 = sadd.s32 1, %s18
    $region7: #{tpu_custom_call.1} parent=1 // loop_footer_branch
      %17 = sbr.rel target = $region3
    $region8: #{tpu_custom_call.1} parent=1 // loop_exit
      _
    %1653 = vsyncpa [#allocation3], 1
    %s1654 = scalar_lea.sflag [#allocation3], 1
    %1655 = vsyncpa %s1654, 1
    %1656 = vsyncpa [#allocation6], 1
    %1657 = vsyncpa [#allocation4], 1
    %s1658 = scalar_lea.sflag [#allocation4], 1
    %1659 = vsyncpa %s1658, 1

</llo_original>
